<compile_context>
chip_gen: v7x
topology: tpu7x:2x2x1
jax: 0.10.0
libtpu: 0.0.40
codegen_flags: <defaults>
</compile_context>

<pallas_src>
import math

import jax
import jax.numpy as jnp
from jax.experimental import pallas as pl
from jax.experimental.pallas import tpu as pltpu


# ----------------------------------------------------------------------------
# Small helpers
# ----------------------------------------------------------------------------
_VMEM_LIMIT = 32 * 1024 * 1024          # safe on v5e/v6e (128 MiB) and v7x (64 MiB)
_DIRECT_CONV_VMEM_BUDGET = 6 * 1024 * 1024


def _compiler_params(sem):
    return pltpu.CompilerParams(dimension_semantics=sem, vmem_limit_bytes=_VMEM_LIMIT)


def _pow2_floor(n):
    return 1 << max(0, int(n).bit_length() - 1)


def _row_tile(M, bytes_per_row, target=2 << 20, lo=256, hi=8192):
    """Pick a row-tile size (multiple of 8) targeting ~`target` bytes per grid step."""
    tm = _pow2_floor(min(hi, max(lo, target // max(1, bytes_per_row))))
    if M <= tm:
        return M, 1
    return tm, pl.cdiv(M, tm)


# ----------------------------------------------------------------------------
# Pallas kernel: tiled matmul + bias (+ fused pre-affine/ReLU, + fused post-ReLU)
# ----------------------------------------------------------------------------
def matmul_bias(a, b, bias, *, relu=False, pre_scale=None, pre_shift=None, pre_relu=False):
    """(M,K) @ (K,N) + bias[N].  bf16 MXU, f32 accumulation.

    Optional fused per-column pre-affine (a*scale + shift, then ReLU) applied to the
    activations before the dot -> folds BatchNorm/AdaptiveNorm + ReLU into the matmul.
    """
    M, K = a.shape
    Kb, N = b.shape
    assert K == Kb
    b = b.astype(jnp.bfloat16)
    bias2 = (bias if bias is not None else jnp.zeros((N,), jnp.float32))
    bias2 = bias2.reshape(1, N).astype(jnp.float32)
    fuse_pre = pre_scale is not None

    a_bytes = a.dtype.itemsize
    tm, grid_m = _row_tile(M, K * a_bytes + N * 4)

    def kernel(*refs):
        if fuse_pre:
            a_ref, b_ref, bias_ref, ps_ref, pb_ref, o_ref = refs
            av = a_ref[...].astype(jnp.float32) * ps_ref[...] + pb_ref[...]
            if pre_relu:
                av = jnp.maximum(av, 0.0)
            av = av.astype(jnp.bfloat16)
        else:
            a_ref, b_ref, bias_ref, o_ref = refs
            av = a_ref[...].astype(jnp.bfloat16)
        acc = jnp.dot(av, b_ref[...], preferred_element_type=jnp.float32)
        acc = acc + bias_ref[...]
        if relu:
            acc = jnp.maximum(acc, 0.0)
        o_ref[...] = acc

    in_specs = [
        pl.BlockSpec((tm, K), lambda i: (i, 0)),
        pl.BlockSpec((K, N), lambda i: (0, 0)),
        pl.BlockSpec((1, N), lambda i: (0, 0)),
    ]
    operands = [a, b, bias2]
    if fuse_pre:
        in_specs += [pl.BlockSpec((1, K), lambda i: (0, 0)),
                     pl.BlockSpec((1, K), lambda i: (0, 0))]
        operands += [pre_scale.reshape(1, K).astype(jnp.float32),
                     pre_shift.reshape(1, K).astype(jnp.float32)]

    return pl.pallas_call(
        kernel,
        out_shape=jax.ShapeDtypeStruct((M, N), jnp.float32),
        grid=(grid_m,),
        in_specs=in_specs,
        out_specs=pl.BlockSpec((tm, N), lambda i: (i, 0)),
        compiler_params=_compiler_params(("parallel",)),
    )(*operands)


# ----------------------------------------------------------------------------
# Pallas kernel: per-channel sum / sum-of-squares on NHWC layout (no transposes)
# ----------------------------------------------------------------------------
def column_sums(x2d):
    M, C = x2d.shape
    tm, grid = _row_tile(M, C * x2d.dtype.itemsize, target=1 << 20)
    need_mask = (M % tm) != 0

    def kernel(x_ref, s_ref, q_ref):
        i = pl.program_id(0)
        xv = x_ref[...].astype(jnp.float32)
        if need_mask:
            rows = i * tm + jax.lax.broadcasted_iota(jnp.int32, (tm, 1), 0)
            xv = jnp.where(rows < M, xv, 0.0)
        s = jnp.sum(xv, axis=0, keepdims=True)
        q = jnp.sum(xv * xv, axis=0, keepdims=True)

        @pl.when(i == 0)
        def _():
            s_ref[...] = s
            q_ref[...] = q

        @pl.when(i > 0)
        def _():
            s_ref[...] += s
            q_ref[...] += q

    return pl.pallas_call(
        kernel,
        out_shape=(jax.ShapeDtypeStruct((1, C), jnp.float32),
                   jax.ShapeDtypeStruct((1, C), jnp.float32)),
        grid=(grid,),
        in_specs=[pl.BlockSpec((tm, C), lambda i: (i, 0))],
        out_specs=(pl.BlockSpec((1, C), lambda i: (0, 0)),
                   pl.BlockSpec((1, C), lambda i: (0, 0))),
        compiler_params=_compiler_params(("arbitrary",)),
    )(x2d)


def _bn_affine_from_stats(ssum, ssq, count, gamma, beta, eps):
    mean = ssum / count
    var = jnp.maximum(ssq / count - mean * mean, 0.0)     # biased variance
    rstd = jax.lax.rsqrt(var + eps)
    A = rstd * gamma.reshape(1, -1)
    B = beta.reshape(1, -1) - mean * A
    return A, B


def batch_norm_affine(x2d, gamma, beta, eps):
    ssum, ssq = column_sums(x2d)
    return _bn_affine_from_stats(ssum, ssq, float(x2d.shape[0]), gamma, beta, eps)


def adaptive_norm_affine(x2d, p):
    A, B = batch_norm_affine(x2d, p['gamma'], p['beta'], eps=1e-3)
    return p['w0'] + p['w1'] * A, p['w1'] * B


# ----------------------------------------------------------------------------
# Pallas kernel: fused per-channel affine (+ residual add, + ReLU)
# ----------------------------------------------------------------------------
def fused_scale_bias(x2d, A, B, *, add=None, relu=False, out_dtype=jnp.float32):
    M, C = x2d.shape
    nops = 3 if add is None else 4
    tm, grid = _row_tile(M, C * 4 * nops, target=1 << 19)

    def kernel(*refs):
        if add is None:
            x_ref, a_ref, b_ref, o_ref = refs
            v = x_ref[...].astype(jnp.float32) * a_ref[...] + b_ref[...]
        else:
            x_ref, a_ref, b_ref, r_ref, o_ref = refs
            v = (x_ref[...].astype(jnp.float32) * a_ref[...] + b_ref[...]
                 + r_ref[...].astype(jnp.float32))
        if relu:
            v = jnp.maximum(v, 0.0)
        o_ref[...] = v.astype(out_dtype)

    in_specs = [pl.BlockSpec((tm, C), lambda i: (i, 0)),
                pl.BlockSpec((1, C), lambda i: (0, 0)),
                pl.BlockSpec((1, C), lambda i: (0, 0))]
    operands = [x2d, A.reshape(1, C).astype(jnp.float32), B.reshape(1, C).astype(jnp.float32)]
    if add is not None:
        in_specs.append(pl.BlockSpec((tm, C), lambda i: (i, 0)))
        operands.append(add)

    return pl.pallas_call(
        kernel,
        out_shape=jax.ShapeDtypeStruct((M, C), out_dtype),
        grid=(grid,),
        in_specs=in_specs,
        out_specs=pl.BlockSpec((tm, C), lambda i: (i, 0)),
        compiler_params=_compiler_params(("parallel",)),
    )(*operands)


# ----------------------------------------------------------------------------
# Pallas kernel: direct 3x3 stride-1 conv (whole padded input resident in VMEM)
# ----------------------------------------------------------------------------
def _conv3x3_direct_call(xp, wm, bias2, H, W, Cin, Cout, TR):
    grid = H // TR

    def kernel(x_ref, w_ref, b_ref, o_ref):
        r0 = pl.program_id(0) * TR
        acc = jnp.zeros((TR * W, Cout), jnp.float32)
        for ki in range(3):
            for kj in range(3):
                patch = x_ref[pl.ds(r0 + ki, TR), pl.ds(kj, W), :]
                pm = patch.reshape(TR * W, Cin)
                wk = w_ref[pl.ds((ki * 3 + kj) * Cin, Cin), :]
                acc = acc + jnp.dot(pm, wk, preferred_element_type=jnp.float32)
        acc = acc + b_ref[...]
        o_ref[...] = acc.reshape(TR, W, Cout)

    return pl.pallas_call(
        kernel,
        out_shape=jax.ShapeDtypeStruct((H, W, Cout), jnp.float32),
        grid=(grid,),
        in_specs=[pl.BlockSpec((H + 2, W + 2, Cin), lambda i: (0, 0, 0)),
                  pl.BlockSpec((9 * Cin, Cout), lambda i: (0, 0)),
                  pl.BlockSpec((1, Cout), lambda i: (0, 0))],
        out_specs=pl.BlockSpec((TR, W, Cout), lambda i: (i, 0, 0)),
        compiler_params=_compiler_params(("parallel",)),
    )(xp, wm, bias2)


def conv3x3_direct(x, w, b):
    N, H, W, Cin = x.shape
    Cout = w.shape[-1]
    assert N == 1
    xp = jnp.pad(x[0].astype(jnp.bfloat16), ((1, 1), (1, 1), (0, 0)))
    wm = w.reshape(9 * Cin, Cout).astype(jnp.bfloat16)
    bias2 = (b if b is not None else jnp.zeros((Cout,), jnp.float32))
    bias2 = bias2.reshape(1, Cout).astype(jnp.float32)
    TR = H if H <= 16 else (16 if H % 16 == 0 else 8)
    out = _conv3x3_direct_call(xp, wm, bias2, H, W, Cin, Cout, TR)
    return out[None]


_DIRECT_CONV_OK = None


def _direct_conv_supported():
    global _DIRECT_CONV_OK
    if _DIRECT_CONV_OK is None:
        try:
            xprobe = jnp.ones((1, 32, 32, 16), jnp.float32)
            wprobe = jnp.ones((3, 3, 16, 16), jnp.float32) * 0.01
            jax.block_until_ready(conv3x3_direct(xprobe, wprobe, None))
            _DIRECT_CONV_OK = True
        except Exception:
            _DIRECT_CONV_OK = False
    return _DIRECT_CONV_OK


# ----------------------------------------------------------------------------
# Conv dispatcher (1x1 -> matmul, 3x3/s1 -> direct kernel, otherwise bf16 im2col)
# ----------------------------------------------------------------------------
def _im2col(x, kh, kw, stride, padding, dilation):
    N, H, W, C = x.shape
    Ho = (H + 2 * padding - dilation * (kh - 1) - 1) // stride + 1
    Wo = (W + 2 * padding - dilation * (kw - 1) - 1) // stride + 1
    xp = jnp.pad(x.astype(jnp.bfloat16),
                 ((0, 0), (padding, padding), (padding, padding), (0, 0)))
    patches = []
    for i in range(kh):
        for j in range(kw):
            ys = i * dilation
            xs = j * dilation
            patches.append(
                xp[:, ys:ys + stride * (Ho - 1) + 1:stride,
                      xs:xs + stride * (Wo - 1) + 1:stride, :])
    col = jnp.stack(patches, axis=3)  # (N, Ho, Wo, kh*kw, C) bf16
    return col.reshape(N * Ho * Wo, kh * kw * C), Ho, Wo


def conv2d(x, w, b=None, stride=1, padding=0, dilation=1, relu=False):
    kh, kw, cin, cout = w.shape
    N, H, W, _ = x.shape
    if kh == 1 and kw == 1 and dilation == 1:
        if stride > 1:
            x = x[:, ::stride, ::stride, :]
            N, H, W, _ = x.shape
        out = matmul_bias(x.reshape(N * H * W, cin), w.reshape(cin, cout), b, relu=relu)
        return out.reshape(N, H, W, cout)
    if (kh == 3 and kw == 3 and stride == 1 and dilation == 1 and padding == 1
            and N == 1 and not relu and W % 8 == 0 and H % 8 == 0
            and (H + 2) * (W + 2) * cin * 2 <= _DIRECT_CONV_VMEM_BUDGET
            and _direct_conv_supported()):
        return conv3x3_direct(x, w, b)
    col, Ho, Wo = _im2col(x, kh, kw, stride, padding, dilation)
    out = matmul_bias(col, w.reshape(kh * kw * cin, cout), b, relu=relu)
    return out.reshape(N, Ho, Wo, cout)


# ----------------------------------------------------------------------------
# Pallas kernel: depthwise 3x3 box filter (guided filter)
# ----------------------------------------------------------------------------
def _box_filter_pallas(x):
    N, H, W, C = x.shape
    assert N == 1
    xp = jnp.pad(x[0].astype(jnp.float32), ((1, 1), (1, 1), (0, 0)))

    def kernel(x_ref, o_ref):
        acc = jnp.zeros((H, W, C), jnp.float32)
        for di in range(3):
            for dj in range(3):
                acc = acc + x_ref[di:di + H, dj:dj + W, :]
        o_ref[...] = acc

    out = pl.pallas_call(
        kernel,
        out_shape=jax.ShapeDtypeStruct((H, W, C), jnp.float32),
        grid=(1,),
        in_specs=[pl.BlockSpec((H + 2, W + 2, C), lambda i: (0, 0, 0))],
        out_specs=pl.BlockSpec((H, W, C), lambda i: (0, 0, 0)),
        compiler_params=_compiler_params(("arbitrary",)),
    )(xp)
    return out[None]


def _box_filter_jax(x):
    xp = jnp.pad(x.astype(jnp.float32), ((0, 0), (1, 1), (1, 1), (0, 0)))
    H, W = x.shape[1], x.shape[2]
    acc = jnp.zeros_like(x, dtype=jnp.float32)
    for di in range(3):
        for dj in range(3):
            acc = acc + xp[:, di:di + H, dj:dj + W, :]
    return acc


_BOX_OK = None


def box_filter_3x3(x):
    global _BOX_OK
    if _BOX_OK is None:
        try:
            jax.block_until_ready(_box_filter_pallas(jnp.ones((1, 8, 8, 13), jnp.float32)))
            _BOX_OK = True
        except Exception:
            _BOX_OK = False
    return _box_filter_pallas(x) if _BOX_OK else _box_filter_jax(x)


# ----------------------------------------------------------------------------
# Pallas kernel: guided-filter output  mean_A * x_hr + mean_b  (lane-dense)
# ----------------------------------------------------------------------------
def fused_mul_add(a, x, b):
    N, H, W, C = a.shape
    M, L = N * H, W * C
    a2 = a.reshape(M, L).astype(jnp.float32)
    x2 = x.reshape(M, L).astype(jnp.float32)
    b2 = b.reshape(M, L).astype(jnp.float32)
    tm, grid = _row_tile(M, L * 16, target=1 << 20, lo=32)

    def kernel(a_ref, x_ref, b_ref, o_ref):
        o_ref[...] = a_ref[...] * x_ref[...] + b_ref[...]

    out = pl.pallas_call(
        kernel,
        out_shape=jax.ShapeDtypeStruct((M, L), jnp.float32),
        grid=(grid,),
        in_specs=[pl.BlockSpec((tm, L), lambda i: (i, 0))] * 3,
        out_specs=pl.BlockSpec((tm, L), lambda i: (i, 0)),
        compiler_params=_compiler_params(("parallel",)),
    )(a2, x2, b2)
    return out.reshape(N, H, W, C)


# ----------------------------------------------------------------------------
# Norm application helpers (Pallas stats + Pallas fused affine)
# ----------------------------------------------------------------------------
def instance_norm_apply(x, *, relu=False, add=None, out_dtype=jnp.float32, eps=1e-5):
    N, H, W, C = x.shape
    ones = jnp.ones((C,), jnp.float32)
    zeros = jnp.zeros((C,), jnp.float32)
    outs = []
    for n in range(N):
        x2d = x[n].reshape(H * W, C)
        ssum, ssq = column_sums(x2d)
        A, B = _bn_affine_from_stats(ssum, ssq, float(H * W), ones, zeros, eps)
        a2d = None if add is None else add[n].reshape(H * W, C)
        outs.append(fused_scale_bias(x2d, A, B, add=a2d, relu=relu,
                                     out_dtype=out_dtype).reshape(H, W, C))
    return jnp.stack(outs, axis=0)


# ----------------------------------------------------------------------------
# Glue in plain JAX (resize / pooling)
# ----------------------------------------------------------------------------
def max_pool_3x3_s2_p1(x):
    N, H, W, C = x.shape
    Ho = (H + 2 - 3) // 2 + 1
    Wo = (W + 2 - 3) // 2 + 1
    xp = jnp.pad(x, ((0, 0), (1, 1), (1, 1), (0, 0)), constant_values=-jnp.inf)
    out = None
    for i in range(3):
        for j in range(3):
            p = xp[:, i:i + 2 * (Ho - 1) + 1:2, j:j + 2 * (Wo - 1) + 1:2, :]
            out = p if out is None else jnp.maximum(out, p)
    return out


def adaptive_avg_pool(x, oh, ow):
    N, H, W, C = x.shape
    rows = []
    for i in range(oh):
        hs, he = (i * H) // oh, ((i + 1) * H + oh - 1) // oh
        cols = []
        for j in range(ow):
            ws, we = (j * W) // ow, ((j + 1) * W + ow - 1) // ow
            cols.append(jnp.mean(x[:, hs:he, ws:we, :], axis=(1, 2)))
        rows.append(jnp.stack(cols, axis=1))
    return jnp.stack(rows, axis=1)


def _interp_idx(in_size, out_size, align_corners):
    if align_corners:
        if out_size == 1:
            src = jnp.zeros((1,), jnp.float32)
        else:
            src = jnp.arange(out_size, dtype=jnp.float32) * ((in_size - 1) / (out_size - 1))
    else:
        scale = in_size / out_size
        src = (jnp.arange(out_size, dtype=jnp.float32) + 0.5) * scale - 0.5
        src = jnp.maximum(src, 0.0)
    i0 = jnp.clip(jnp.floor(src).astype(jnp.int32), 0, in_size - 1)
    i1 = jnp.minimum(i0 + 1, in_size - 1)
    w1 = src - i0.astype(jnp.float32)
    w0 = 1.0 - w1
    return i0, i1, w0, w1


# TODO(synk): bilinear resampling (gather-based) stays in plain JAX; no clean BlockSpec fit.
def bilinear_resize(x, oh, ow, align_corners=False):
    N, H, W, C = x.shape
    if (oh, ow) == (H, W):
        return x
    i0, i1, wy0, wy1 = _interp_idx(H, oh, align_corners)
    j0, j1, wx0, wx1 = _interp_idx(W, ow, align_corners)
    rows = (jnp.take(x, i0, axis=1) * wy0[None, :, None, None]
            + jnp.take(x, i1, axis=1) * wy1[None, :, None, None])
    out = (jnp.take(rows, j0, axis=2) * wx0[None, None, :, None]
           + jnp.take(rows, j1, axis=2) * wx1[None, None, :, None])
    return out


# ----------------------------------------------------------------------------
# Network sub-modules
# ----------------------------------------------------------------------------
def relu_conv(x, p, k):
    # ReluConv(norm=True): BatchNorm -> ReLU -> Conv(k, pad=k//2)
    N, H, W, C = x.shape
    x2d = x.reshape(N * H * W, C)
    A, B = batch_norm_affine(x2d, p['bn']['gamma'], p['bn']['beta'], eps=1e-5)
    w, b = p['conv']['w'], p['conv']['b']
    cout = w.shape[-1]
    if k == 1:
        out = matmul_bias(x2d, w.reshape(C, cout), b,
                          pre_scale=A, pre_shift=B, pre_relu=True)
        return out.reshape(N, H, W, cout)
    xn = fused_scale_bias(x2d, A, B, relu=True,
                          out_dtype=jnp.bfloat16).reshape(N, H, W, C)
    return conv2d(xn, w, b, stride=1, padding=k // 2)


def basic_block(x, p, stride):
    residual = x
    out = conv2d(x, p['conv1']['w'], p['conv1']['b'], stride=stride, padding=1)
    hidden = instance_norm_apply(out, relu=True, out_dtype=jnp.bfloat16)
    out2 = conv2d(hidden, p['conv2']['w'], p['conv2']['b'], stride=1, padding=1)
    if p['down'] is not None:
        residual = conv2d(residual, p['down']['w'], None, stride=stride, padding=0)
    skip = instance_norm_apply(out2, add=residual)
    return skip, jnp.maximum(skip, 0.0)


def res_layer(x, blocks, stride):
    skip = None
    for bi, bp in enumerate(blocks):
        skip, x = basic_block(x, bp, stride if bi == 0 else 1)
    return skip, x


def encoder_fwd(x1, P):
    x2 = conv2d(x1, P['conv1']['w'], P['conv1']['b'], stride=2, padding=3, relu=True)
    x = max_pool_3x3_s2_p1(x2)
    x4, x = res_layer(x, P['layer1'], 1)
    x8, x = res_layer(x, P['layer2'], 2)
    x16, x = res_layer(x, P['layer3'], 2)
    x32, x = res_layer(x, P['layer4'], 2)
    return x1, x2, x4, x8, x16, x32


def spp_fwd(x, P, grids=(8, 4, 2, 1), num_levels=3):
    _, H, W, _ = x.shape
    ar = W / H
    x = relu_conv(x, P['spp_bn'], 1)
    levels = [x]
    for i in range(num_levels):
        gh = grids[i]
        gw = max(1, round(ar * grids[i]))
        pooled = adaptive_avg_pool(x, gh, gw)
        lvl = relu_conv(pooled, P['spp%d' % i], 1)
        lvl = bilinear_resize(lvl, H, W, align_corners=False)
        levels.append(lvl)
    cat = jnp.concatenate(levels, axis=-1)
    return relu_conv(cat, P['spp_fuse'], 1)


def upsample_block(skip, x, P):
    skip = relu_conv(skip, P['skip'], 1)
    _, sh, sw, _ = skip.shape
    x = bilinear_resize(x, sh, sw, align_corners=False)
    x = x + skip
    return relu_conv(x, P['blend'], 3)


def decoder_fwd(x32, x16, x8, x4, P):
    out = upsample_block(x16, x32, P['up1'])
    out = upsample_block(x8, out, P['up2'])
    out = upsample_block(x4, out, P['up3'])
    return out


def guided_map_fwd(x, P):
    # Conv1x1(4->16, no bias) -> AdaptiveNorm -> ReLU -> Conv1x1(16->3)
    N, H, W, _ = x.shape
    h = conv2d(x, P['c0']['w'])
    h2d = h.reshape(N * H * W, h.shape[-1])
    A, B = adaptive_norm_affine(h2d, P['an'])
    w1 = P['c1']['w']
    out = matmul_bias(h2d, w1.reshape(w1.shape[2], w1.shape[3]), P['c1']['b'],
                      pre_scale=A, pre_shift=B, pre_relu=True)
    return out.reshape(N, H, W, 3)


def conv_guided_filter(x_lr, y_lr, x_hr, P):
    n, h, w, _ = x_lr.shape
    _, hh, wh, _ = x_hr.shape
    ones = jnp.ones((n, h, w, 1), jnp.float32)
    stacked = jnp.concatenate([ones, x_lr, y_lr, x_lr * y_lr, x_lr * x_lr], axis=-1)
    boxed = box_filter_3x3(stacked)
    Nm = boxed[..., 0:1]
    mean_x = boxed[..., 1:4] / Nm
    mean_y = boxed[..., 4:7] / Nm
    cov_xy = boxed[..., 7:10] / Nm - mean_x * mean_y
    var_x = boxed[..., 10:13] / Nm - mean_x * mean_x

    Acat = jnp.concatenate([cov_xy, var_x], axis=-1)
    h0 = conv2d(Acat, P['a0']['w'])
    h0_2d = h0.reshape(n * h * w, 32)
    A0, B0 = adaptive_norm_affine(h0_2d, P['an0'])
    h1 = matmul_bias(h0_2d, P['a1']['w'].reshape(32, 32), None,
                     pre_scale=A0, pre_shift=B0, pre_relu=True)
    A1, B1 = adaptive_norm_affine(h1, P['an1'])
    Aout = matmul_bias(h1, P['a2']['w'].reshape(32, 3), None,
                       pre_scale=A1, pre_shift=B1, pre_relu=True)
    A = Aout.reshape(n, h, w, 3)
    b = mean_y - A * mean_x
    mean_A = bilinear_resize(A, hh, wh, align_corners=True)
    mean_b = bilinear_resize(b, hh, wh, align_corners=True)
    return fused_mul_add(mean_A, x_hr, mean_b)


def gen_y_forward(params, x_nchw, ill_nchw, scale_factor=0.25):
    x = jnp.transpose(x_nchw, (0, 2, 3, 1)).astype(jnp.float32)
    ill = jnp.transpose(ill_nchw, (0, 2, 3, 1)).astype(jnp.float32)
    N, H, W, _ = x.shape

    # --- branch 1: predict Y from the 0.25x input ---
    cat = jnp.concatenate([x, ill], axis=-1)
    lh, lw = int(H * scale_factor), int(W * scale_factor)
    input_geny = bilinear_resize(cat, lh, lw, align_corners=False)
    _, y2, y4, y8, y16, y32 = encoder_fwd(input_geny, params['encoder'])
    y32 = spp_fwd(y32, params['spp'])
    y_out_x4 = decoder_fwd(y32, y16, y8, y4, params['decoder2'])
    y_out_x4 = relu_conv(y_out_x4, params['post2'], 1)
    Y = bilinear_resize(y_out_x4, H, W, align_corners=False)

    # --- branch 2: full-res enhancement conditioned on Y (shared encoder / spp) ---
    inp = jnp.concatenate([x, Y], axis=-1)
    _, x2, x4, x8, x16, x32 = encoder_fwd(inp, params['encoder'])
    x32 = spp_fwd(x32, params['spp'])
    out_x4 = decoder_fwd(x32, x16, x8, x4, params['decoder'])
    out_x4 = relu_conv(out_x4, params['post'], 1)

    x_h = inp
    x_l = bilinear_resize(x_h, H // 4, W // 4, align_corners=False)
    g_l = guided_map_fwd(x_l, params['guided_map'])
    g_h = guided_map_fwd(x_h, params['guided_map'])
    out = conv_guided_filter(g_l, out_x4, g_h, params['filter'])

    return jnp.transpose(Y, (0, 3, 1, 2)), jnp.transpose(out, (0, 3, 1, 2))


# ----------------------------------------------------------------------------
# Deterministic parameter construction (matches PyTorch __init__ shapes)
# ----------------------------------------------------------------------------
class _KeyGen:
    def __init__(self, seed):
        self._key = jax.random.PRNGKey(seed)

    def __call__(self):
        self._key, sub = jax.random.split(self._key)
        return sub


def _conv_p(kg, kh, kw, cin, cout, bias=True):
    fan_in = kh * kw * cin
    w = jax.random.normal(kg(), (kh, kw, cin, cout), jnp.float32) / math.sqrt(fan_in)
    b = 0.01 * jax.random.normal(kg(), (cout,), jnp.float32) if bias else None
    return {'w': w, 'b': b}


def _bn_p(c):
    return {'gamma': jnp.ones((c,), jnp.float32), 'beta': jnp.zeros((c,), jnp.float32)}


def _relu_conv_p(kg, cin, cout, k):
    return {'bn': _bn_p(cin), 'conv': _conv_p(kg, k, k, cin, cout, bias=True)}


def _adanorm_p(c):
    return {'w0': jnp.asarray(0.0, jnp.float32), 'w1': jnp.asarray(1.0, jnp.float32),
            'gamma': jnp.ones((c,), jnp.float32), 'beta': jnp.zeros((c,), jnp.float32)}


def _block_p(kg, cin, cout, has_down):
    return {'conv1': _conv_p(kg, 3, 3, cin, cout),
            'conv2': _conv_p(kg, 3, 3, cout, cout),
            'down': _conv_p(kg, 1, 1, cin, cout, bias=False) if has_down else None}


def _layer_p(kg, cin, cout, stride):
    has_down = (stride != 1) or (cin != cout)
    return [_block_p(kg, cin, cout, has_down), _block_p(kg, cout, cout, False)]


def _decoder_p(kg, features, in_dim):
    return {'up1': {'skip': _relu_conv_p(kg, features[-2], in_dim, 1),
                    'blend': _relu_conv_p(kg, in_dim, features[-2], 3)},
            'up2': {'skip': _relu_conv_p(kg, features[-3], features[-2], 1),
                    'blend': _relu_conv_p(kg, features[-2], features[-3], 3)},
            'up3': {'skip': _relu_conv_p(kg, features[-4], features[-3], 1),
                    'blend': _relu_conv_p(kg, features[-3], features[-4], 3)}}


def init_params(seed=1234, incolor=4, outcolor=3, features=(16, 32, 64, 64), sppdim=64):
    kg = _KeyGen(seed)
    bt_size, num_levels = 128, 3
    level_size = sppdim // num_levels
    final_size = bt_size + num_levels * level_size
    enc = {'conv1': _conv_p(kg, 7, 7, incolor, features[0]),
           'layer1': _layer_p(kg, features[0], features[0], 1),
           'layer2': _layer_p(kg, features[0], features[1], 2),
           'layer3': _layer_p(kg, features[1], features[2], 2),
           'layer4': _layer_p(kg, features[2], features[3], 2)}
    spp = {'spp_bn': _relu_conv_p(kg, features[3], bt_size, 1)}
    for i in range(num_levels):
        spp['spp%d' % i] = _relu_conv_p(kg, bt_size, level_size, 1)
    spp['spp_fuse'] = _relu_conv_p(kg, final_size, sppdim, 1)
    return {
        'encoder': enc,
        'spp': spp,
        'decoder2': _decoder_p(kg, list(features), sppdim),
        'post2': _relu_conv_p(kg, features[0], 1, 1),
        'decoder': _decoder_p(kg, list(features), sppdim),
        'post': _relu_conv_p(kg, features[0], outcolor, 1),
        'filter': {'a0': _conv_p(kg, 1, 1, 6, 32, bias=False), 'an0': _adanorm_p(32),
                   'a1': _conv_p(kg, 1, 1, 32, 32, bias=False), 'an1': _adanorm_p(32),
                   'a2': _conv_p(kg, 1, 1, 32, 3, bias=False)},
        'guided_map': {'c0': _conv_p(kg, 1, 1, 4, 16, bias=False), 'an': _adanorm_p(16),
                       'c1': _conv_p(kg, 1, 1, 16, 3, bias=True)},
    }


# ----------------------------------------------------------------------------
if __name__ == "__main__":
    # 256x256 is the smallest input consistent with the module: the 0.25x branch is
    # downsampled by a further 32x in the encoder, and InstanceNorm / training-mode
    # BatchNorm need more than one element to normalize over.
    H = W = 256
    key = jax.random.PRNGKey(0)
    kx, ki = jax.random.split(key)
    x = jax.random.uniform(kx, (1, 3, H, W), jnp.float32)     # RGB image (NCHW)
    ill = jax.random.uniform(ki, (1, 1, H, W), jnp.float32)   # illumination map (NCHW)

    params = init_params(seed=1234)
    Y, out = gen_y_forward(params, x, ill)
    Y = jax.block_until_ready(Y)
    out = jax.block_until_ready(out)

    assert Y.shape == (1, 1, H, W) and out.shape == (1, 3, H, W)
    assert bool(jnp.all(jnp.isfinite(Y))) and bool(jnp.all(jnp.isfinite(out)))
    print("KERNEL_OK")
</pallas_src>

<mosaic_0001>
module attributes {stable_mosaic.version = 11 : i64} {
  func.func @kernel(%arg0: i32, %arg1: memref<1024x196xbf16, #tpu.memory_space<vmem>>, %arg2: memref<196x16xbf16, #tpu.memory_space<vmem>>, %arg3: memref<1x16xf32, #tpu.memory_space<vmem>>, %arg4: memref<1024x16xf32, #tpu.memory_space<vmem>>) attributes {dimension_semantics = [#tpu.dimension_semantics<parallel>], iteration_bounds = array<i64: 1>, scalar_prefetch = 0 : i64, scratch_operands = 0 : i64, tpu.core_type = #tpu.core_type<tc>, window_params = [{transform_indices = @transform_0, window_bounds = array<i64: 1024, 196>}, {pipeline_mode = #tpu.pipeline_mode<synchronous>, transform_indices = @transform_1, window_bounds = array<i64: 196, 16>}, {pipeline_mode = #tpu.pipeline_mode<synchronous>, transform_indices = @transform_2, window_bounds = array<i64: 1, 16>}, {transform_indices = @transform_3, window_bounds = array<i64: 1024, 16>}]} {
    %c0 = arith.constant 0 : index
    %c0_0 = arith.constant 0 : index
    %0 = vector.load %arg1[%c0, %c0_0] : memref<1024x196xbf16, #tpu.memory_space<vmem>>, vector<1024x196xbf16>
    %c0_1 = arith.constant 0 : index
    %c0_2 = arith.constant 0 : index
    %1 = vector.load %arg2[%c0_1, %c0_2] : memref<196x16xbf16, #tpu.memory_space<vmem>>, vector<196x16xbf16>
    %cst = arith.constant dense<0.000000e+00> : vector<1024x16xf32>
    %2 = tpu.matmul %0, %1, %cst {dimension_numbers = #tpu.dot_dimension_numbers<[1], [0], [0], [1], [0, 0, 1, 1], [], []>} : vector<1024x196xbf16>, vector<196x16xbf16>, vector<1024x16xf32> -> vector<1024x16xf32>
    %c0_3 = arith.constant 0 : index
    %c0_4 = arith.constant 0 : index
    %3 = vector.load %arg3[%c0_3, %c0_4] : memref<1x16xf32, #tpu.memory_space<vmem>>, vector<1x16xf32>
    %4 = vector.broadcast %3 : vector<1x16xf32> to vector<1024x16xf32>
    %5 = arith.addf %2, %4 : vector<1024x16xf32>
    %cst_5 = arith.constant 0.000000e+00 : f32
    %6 = vector.broadcast %cst_5 : f32 to vector<1024x16xf32>
    %7 = arith.maximumf %5, %6 : vector<1024x16xf32>
    %c0_6 = arith.constant 0 : index
    %c0_7 = arith.constant 0 : index
    %8 = vector.load %arg4[%c0_6, %c0_7] : memref<1024x16xf32, #tpu.memory_space<vmem>>, vector<1024x16xf32>
    tpu.vector_store %arg4[%c0_6, %c0_7], %7 {strides = array<i32>} : memref<1024x16xf32, #tpu.memory_space<vmem>>, vector<1024x16xf32>,
    return
  }
  func.func @transform_0(%arg0: i32) -> (i32, i32) {
    %c0_i32 = arith.constant 0 : i32
    %c0_i32_0 = arith.constant 0 : i32
    return %arg0, %c0_i32 : i32, i32
  }
  func.func @transform_1(%arg0: i32) -> (i32, i32) {
    %c0_i32 = arith.constant 0 : i32
    %c0_i32_0 = arith.constant 0 : i32
    %c0_i32_1 = arith.constant 0 : i32
    return %c0_i32, %c0_i32_0 : i32, i32
  }
  func.func @transform_2(%arg0: i32) -> (i32, i32) {
    %c0_i32 = arith.constant 0 : i32
    %c0_i32_0 = arith.constant 0 : i32
    %c0_i32_1 = arith.constant 0 : i32
    return %c0_i32, %c0_i32_0 : i32, i32
  }
  func.func @transform_3(%arg0: i32) -> (i32, i32) {
    %c0_i32 = arith.constant 0 : i32
    %c0_i32_0 = arith.constant 0 : i32
    return %arg0, %c0_i32 : i32, i32
  }
}

</mosaic_0001>

<llo_original>
// kernel: tpu_custom_call.1
$region0: #{tpu_custom_call.1}
  #allocation0 [shape = 'u32[]', space=smem, size = 0x4, offset = 0x4, fixed_abs, tag = 'smem constant byte address 0x4 - core index']
  #allocation1 [shape = 'u32[144,128]{1,0:T(1,128)}', space=vmem, size = 0x12000, scoped, tag = 'internal scratch']
  %s0 = inlined_call_operand.vmem [shape: bf16[1024,196], index: 0, kind: input, shape index: {}]
  %s1 = inlined_call_operand.vmem [shape: bf16[196,16], index: 1, kind: input, shape index: {}]
  %s2 = inlined_call_operand.vmem [shape: f32[1,16], index: 2, kind: input, shape index: {}]
  %s3 = inlined_call_operand.vmem [shape: f32[1024,16], index: 3, kind: output, shape index: {}]
  %s4 = sld [smem:[#allocation0]]
  $region22: #{tpu_custom_call.1} parent=0
    _
  %s6 = ssub.s32 1, %s4
  %s7 = scalar_select 0, %s6, %s4
  // Predicated region
  $region2: #{tpu_custom_call.1} parent=0 // pred_check
    _
  $region3: #{tpu_custom_call.1} parent=0 // pred_check_branch
    %9 = sbr.rel (0) target = $region5
  $region4: #{tpu_custom_call.1} parent=0 // pred_region
    _
  $region5: #{tpu_custom_call.1} parent=0 // pred_fallthru
    _
  // Predicated region
  $region6: #{tpu_custom_call.1} parent=0 // pred_check
    _
  $region7: #{tpu_custom_call.1} parent=0 // pred_check_branch
    %11 = sbr.rel (0) target = $region9
  $region8: #{tpu_custom_call.1} parent=0 // pred_region
    _
  $region9: #{tpu_custom_call.1} parent=0 // pred_fallthru
    _
  // Predicated region
  $region10: #{tpu_custom_call.1} parent=0 // pred_check
    _
  $region11: #{tpu_custom_call.1} parent=0 // pred_check_branch
    %13 = sbr.rel (0) target = $region13
  $region12: #{tpu_custom_call.1} parent=0 // pred_region
    _
  $region13: #{tpu_custom_call.1} parent=0 // pred_fallthru
    _
  %v15 = vld [vmem:[%s0] sm:$0xff]
  %v16 = vld [vmem:[%s0 + $0x8] sm:$0xff]
  %v17 = vld [vmem:[%s0 + $0x10] sm:$0xff]
  %v18 = vld [vmem:[%s0 + $0x18] sm:$0xff]
  %v19 = vld [vmem:[%s0 + $0x20] sm:$0xff]
  %v20 = vld [vmem:[%s0 + $0x28] sm:$0xff]
  %v21 = vld [vmem:[%s0 + $0x30] sm:$0xff]
  %v22 = vld [vmem:[%s0 + $0x38] sm:$0xff]
  %v23 = vld [vmem:[%s0 + $0x40] sm:$0xff]
  %v24 = vld [vmem:[%s0 + $0x48] sm:$0xff]
  %v25 = vld [vmem:[%s0 + $0x50] sm:$0xff]
  %v26 = vld [vmem:[%s0 + $0x58] sm:$0xff]
  %v27 = vld [vmem:[%s0 + $0x60] sm:$0xff]
  %v28 = vld [vmem:[%s0 + $0x68] sm:$0xff]
  %v29 = vld [vmem:[%s0 + $0x70] sm:$0xff]
  %v30 = vld [vmem:[%s0 + $0x78] sm:$0xff]
  %v31 = vld [vmem:[%s0 + $0x80] sm:$0xff]
  %v32 = vld [vmem:[%s0 + $0x88] sm:$0xff]
  %v33 = vld [vmem:[%s0 + $0x90] sm:$0xff]
  %v34 = vld [vmem:[%s0 + $0x98] sm:$0xff]
  %v35 = vld [vmem:[%s0 + $0xa0] sm:$0xff]
  %v36 = vld [vmem:[%s0 + $0xa8] sm:$0xff]
  %v37 = vld [vmem:[%s0 + $0xb0] sm:$0xff]
  %v38 = vld [vmem:[%s0 + $0xb8] sm:$0xff]
  %v39 = vld [vmem:[%s0 + $0xc0] sm:$0xff]
  %v40 = vld [vmem:[%s0 + $0xc8] sm:$0xff]
  %v41 = vld [vmem:[%s0 + $0xd0] sm:$0xff]
  %v42 = vld [vmem:[%s0 + $0xd8] sm:$0xff]
  %v43 = vld [vmem:[%s0 + $0xe0] sm:$0xff]
  %v44 = vld [vmem:[%s0 + $0xe8] sm:$0xff]
  %v45 = vld [vmem:[%s0 + $0xf0] sm:$0xff]
  %v46 = vld [vmem:[%s0 + $0xf8] sm:$0xff]
  %v47 = vld [vmem:[%s0 + $0x100] sm:$0xff]
  %v48 = vld [vmem:[%s0 + $0x108] sm:$0xff]
  %v49 = vld [vmem:[%s0 + $0x110] sm:$0xff]
  %v50 = vld [vmem:[%s0 + $0x118] sm:$0xff]
  %v51 = vld [vmem:[%s0 + $0x120] sm:$0xff]
  %v52 = vld [vmem:[%s0 + $0x128] sm:$0xff]
  %v53 = vld [vmem:[%s0 + $0x130] sm:$0xff]
  %v54 = vld [vmem:[%s0 + $0x138] sm:$0xff]
  %v55 = vld [vmem:[%s0 + $0x140] sm:$0xff]
  %v56 = vld [vmem:[%s0 + $0x148] sm:$0xff]
  %v57 = vld [vmem:[%s0 + $0x150] sm:$0xff]
  %v58 = vld [vmem:[%s0 + $0x158] sm:$0xff]
  %v59 = vld [vmem:[%s0 + $0x160] sm:$0xff]
  %v60 = vld [vmem:[%s0 + $0x168] sm:$0xff]
  %v61 = vld [vmem:[%s0 + $0x170] sm:$0xff]
  %v62 = vld [vmem:[%s0 + $0x178] sm:$0xff]
  %v63 = vld [vmem:[%s0 + $0x180] sm:$0xff]
  %v64 = vld [vmem:[%s0 + $0x188] sm:$0xff]
  %v65 = vld [vmem:[%s0 + $0x190] sm:$0xff]
  %v66 = vld [vmem:[%s0 + $0x198] sm:$0xff]
  %v67 = vld [vmem:[%s0 + $0x1a0] sm:$0xff]
  %v68 = vld [vmem:[%s0 + $0x1a8] sm:$0xff]
  %v69 = vld [vmem:[%s0 + $0x1b0] sm:$0xff]
  %v70 = vld [vmem:[%s0 + $0x1b8] sm:$0xff]
  %v71 = vld [vmem:[%s0 + $0x1c0] sm:$0xff]
  %v72 = vld [vmem:[%s0 + $0x1c8] sm:$0xff]
  %v73 = vld [vmem:[%s0 + $0x1d0] sm:$0xff]
  %v74 = vld [vmem:[%s0 + $0x1d8] sm:$0xff]
  %v75 = vld [vmem:[%s0 + $0x1e0] sm:$0xff]
  %v76 = vld [vmem:[%s0 + $0x1e8] sm:$0xff]
  %v77 = vld [vmem:[%s0 + $0x1f0] sm:$0xff]
  %v78 = vld [vmem:[%s0 + $0x1f8] sm:$0xff]
  %v79 = vld [vmem:[%s0 + $0x200] sm:$0xff]
  %v80 = vld [vmem:[%s0 + $0x208] sm:$0xff]
  %v81 = vld [vmem:[%s0 + $0x210] sm:$0xff]
  %v82 = vld [vmem:[%s0 + $0x218] sm:$0xff]
  %v83 = vld [vmem:[%s0 + $0x220] sm:$0xff]
  %v84 = vld [vmem:[%s0 + $0x228] sm:$0xff]
  %v85 = vld [vmem:[%s0 + $0x230] sm:$0xff]
  %v86 = vld [vmem:[%s0 + $0x238] sm:$0xff]
  %v87 = vld [vmem:[%s0 + $0x240] sm:$0xff]
  %v88 = vld [vmem:[%s0 + $0x248] sm:$0xff]
  %v89 = vld [vmem:[%s0 + $0x250] sm:$0xff]
  %v90 = vld [vmem:[%s0 + $0x258] sm:$0xff]
  %v91 = vld [vmem:[%s0 + $0x260] sm:$0xff]
  %v92 = vld [vmem:[%s0 + $0x268] sm:$0xff]
  %v93 = vld [vmem:[%s0 + $0x270] sm:$0xff]
  %v94 = vld [vmem:[%s0 + $0x278] sm:$0xff]
  %v95 = vld [vmem:[%s0 + $0x280] sm:$0xff]
  %v96 = vld [vmem:[%s0 + $0x288] sm:$0xff]
  %v97 = vld [vmem:[%s0 + $0x290] sm:$0xff]
  %v98 = vld [vmem:[%s0 + $0x298] sm:$0xff]
  %v99 = vld [vmem:[%s0 + $0x2a0] sm:$0xff]
  %v100 = vld [vmem:[%s0 + $0x2a8] sm:$0xff]
  %v101 = vld [vmem:[%s0 + $0x2b0] sm:$0xff]
  %v102 = vld [vmem:[%s0 + $0x2b8] sm:$0xff]
  %v103 = vld [vmem:[%s0 + $0x2c0] sm:$0xff]
  %v104 = vld [vmem:[%s0 + $0x2c8] sm:$0xff]
  %v105 = vld [vmem:[%s0 + $0x2d0] sm:$0xff]
  %v106 = vld [vmem:[%s0 + $0x2d8] sm:$0xff]
  %v107 = vld [vmem:[%s0 + $0x2e0] sm:$0xff]
  %v108 = vld [vmem:[%s0 + $0x2e8] sm:$0xff]
  %v109 = vld [vmem:[%s0 + $0x2f0] sm:$0xff]
  %v110 = vld [vmem:[%s0 + $0x2f8] sm:$0xff]
  %v111 = vld [vmem:[%s0 + $0x300] sm:$0xff]
  %v112 = vld [vmem:[%s0 + $0x308] sm:$0xff]
  %v113 = vld [vmem:[%s0 + $0x310] sm:$0xff]
  %v114 = vld [vmem:[%s0 + $0x318] sm:$0xff]
  %v115 = vld [vmem:[%s0 + $0x320] sm:$0xff]
  %v116 = vld [vmem:[%s0 + $0x328] sm:$0xff]
  %v117 = vld [vmem:[%s0 + $0x330] sm:$0xff]
  %v118 = vld [vmem:[%s0 + $0x338] sm:$0xff]
  %v119 = vld [vmem:[%s0 + $0x340] sm:$0xff]
  %v120 = vld [vmem:[%s0 + $0x348] sm:$0xff]
  %v121 = vld [vmem:[%s0 + $0x350] sm:$0xff]
  %v122 = vld [vmem:[%s0 + $0x358] sm:$0xff]
  %v123 = vld [vmem:[%s0 + $0x360] sm:$0xff]
  %v124 = vld [vmem:[%s0 + $0x368] sm:$0xff]
  %v125 = vld [vmem:[%s0 + $0x370] sm:$0xff]
  %v126 = vld [vmem:[%s0 + $0x378] sm:$0xff]
  %v127 = vld [vmem:[%s0 + $0x380] sm:$0xff]
  %v128 = vld [vmem:[%s0 + $0x388] sm:$0xff]
  %v129 = vld [vmem:[%s0 + $0x390] sm:$0xff]
  %v130 = vld [vmem:[%s0 + $0x398] sm:$0xff]
  %v131 = vld [vmem:[%s0 + $0x3a0] sm:$0xff]
  %v132 = vld [vmem:[%s0 + $0x3a8] sm:$0xff]
  %v133 = vld [vmem:[%s0 + $0x3b0] sm:$0xff]
  %v134 = vld [vmem:[%s0 + $0x3b8] sm:$0xff]
  %v135 = vld [vmem:[%s0 + $0x3c0] sm:$0xff]
  %v136 = vld [vmem:[%s0 + $0x3c8] sm:$0xff]
  %v137 = vld [vmem:[%s0 + $0x3d0] sm:$0xff]
  %v138 = vld [vmem:[%s0 + $0x3d8] sm:$0xff]
  %v139 = vld [vmem:[%s0 + $0x3e0] sm:$0xff]
  %v140 = vld [vmem:[%s0 + $0x3e8] sm:$0xff]
  %v141 = vld [vmem:[%s0 + $0x3f0] sm:$0xff]
  %v142 = vld [vmem:[%s0 + $0x3f8] sm:$0xff]
  %v143 = vld [vmem:[%s1] sm:$0xf]
  %v144 = vld [vmem:[%s1 + $0x4] sm:$0xf]
  %v145 = vld [vmem:[%s1 + $0x8] sm:$0xf]
  %v146 = vld [vmem:[%s1 + $0xc] sm:$0xf]
  %v147 = vld [vmem:[%s1 + $0x10] sm:$0xf]
  %v148 = vld [vmem:[%s1 + $0x14] sm:$0xf]
  %v149 = vld [vmem:[%s1 + $0x18] sm:$0xf]
  %v150 = vld [vmem:[%s1 + $0x1c] sm:$0xf]
  %v151 = vld [vmem:[%s1 + $0x20] sm:$0xf]
  %v152 = vld [vmem:[%s1 + $0x24] sm:$0xf]
  %v153 = vld [vmem:[%s1 + $0x28] sm:$0xf]
  %v154 = vld [vmem:[%s1 + $0x2c] sm:$0xf]
  %v155 = vld [vmem:[%s1 + $0x30] sm:$0xf]
  %v156 = vld [vmem:[%s1 + $0x34] sm:$0xf]
  %v157 = vld [vmem:[%s1 + $0x38] sm:$0xf]
  %v158 = vld [vmem:[%s1 + $0x3c] sm:$0xf]
  %v159 = vld [vmem:[%s1 + $0x40] sm:$0xf]
  %v160 = vld [vmem:[%s1 + $0x44] sm:$0xf]
  %v161 = vld [vmem:[%s1 + $0x48] sm:$0xf]
  %v162 = vld [vmem:[%s1 + $0x4c] sm:$0xf]
  %v163 = vld [vmem:[%s1 + $0x50] sm:$0xf]
  %v164 = vld [vmem:[%s1 + $0x54] sm:$0xf]
  %v165 = vld [vmem:[%s1 + $0x58] sm:$0xf]
  %v166 = vld [vmem:[%s1 + $0x5c] sm:$0xf]
  %v167 = vld [vmem:[%s1 + $0x60] sm:$0x3]
  %v168 = vld [vmem:[%s2] sm:$0x1]
  %v170 = vlaneseq
  %v171 = vshrl.u32 %v170, 7
  %v172 = vsub.s32 0, %v171
  %v173 = vrot.slane %v168, %v172
  %v303 = vunpack.c.l.b16 %v15
  %v304 = vunpack.c.h.b16 %v15
  %v305 = vunpack.c.l.b16 %v16
  %v306 = vunpack.c.h.b16 %v16
  %v307 = vunpack.c.l.b16 %v17
  %v308 = vunpack.c.h.b16 %v17
  %v309 = vunpack.c.l.b16 %v18
  %v310 = vunpack.c.h.b16 %v18
  %v311 = vunpack.c.l.b16 %v19
  %v312 = vunpack.c.h.b16 %v19
  %v313 = vunpack.c.l.b16 %v20
  %v314 = vunpack.c.h.b16 %v20
  %v315 = vunpack.c.l.b16 %v21
  %v316 = vunpack.c.h.b16 %v21
  %v317 = vunpack.c.l.b16 %v22
  %v318 = vunpack.c.h.b16 %v22
  %v319 = vunpack.c.l.b16 %v23
  %v320 = vunpack.c.h.b16 %v23
  %v321 = vunpack.c.l.b16 %v24
  %v322 = vunpack.c.h.b16 %v24
  %v323 = vunpack.c.l.b16 %v25
  %v324 = vunpack.c.h.b16 %v25
  %v325 = vunpack.c.l.b16 %v26
  %v326 = vunpack.c.h.b16 %v26
  %v327 = vunpack.c.l.b16 %v27
  %v328 = vunpack.c.h.b16 %v27
  %v329 = vunpack.c.l.b16 %v28
  %v330 = vunpack.c.h.b16 %v28
  %v331 = vunpack.c.l.b16 %v29
  %v332 = vunpack.c.h.b16 %v29
  %v333 = vunpack.c.l.b16 %v30
  %v334 = vunpack.c.h.b16 %v30
  %v335 = vunpack.c.l.b16 %v31
  %v336 = vunpack.c.h.b16 %v31
  %v337 = vunpack.c.l.b16 %v32
  %v338 = vunpack.c.h.b16 %v32
  %v339 = vunpack.c.l.b16 %v33
  %v340 = vunpack.c.h.b16 %v33
  %v341 = vunpack.c.l.b16 %v34
  %v342 = vunpack.c.h.b16 %v34
  %v343 = vunpack.c.l.b16 %v35
  %v344 = vunpack.c.h.b16 %v35
  %v345 = vunpack.c.l.b16 %v36
  %v346 = vunpack.c.h.b16 %v36
  %v347 = vunpack.c.l.b16 %v37
  %v348 = vunpack.c.h.b16 %v37
  %v349 = vunpack.c.l.b16 %v38
  %v350 = vunpack.c.h.b16 %v38
  %v351 = vunpack.c.l.b16 %v39
  %v352 = vunpack.c.h.b16 %v39
  %v353 = vunpack.c.l.b16 %v40
  %v354 = vunpack.c.h.b16 %v40
  %v355 = vunpack.c.l.b16 %v41
  %v356 = vunpack.c.h.b16 %v41
  %v357 = vunpack.c.l.b16 %v42
  %v358 = vunpack.c.h.b16 %v42
  %v359 = vunpack.c.l.b16 %v43
  %v360 = vunpack.c.h.b16 %v43
  %v361 = vunpack.c.l.b16 %v44
  %v362 = vunpack.c.h.b16 %v44
  %v363 = vunpack.c.l.b16 %v45
  %v364 = vunpack.c.h.b16 %v45
  %v365 = vunpack.c.l.b16 %v46
  %v366 = vunpack.c.h.b16 %v46
  %v367 = vunpack.c.l.b16 %v47
  %v368 = vunpack.c.h.b16 %v47
  %v369 = vunpack.c.l.b16 %v48
  %v370 = vunpack.c.h.b16 %v48
  %v371 = vunpack.c.l.b16 %v49
  %v372 = vunpack.c.h.b16 %v49
  %v373 = vunpack.c.l.b16 %v50
  %v374 = vunpack.c.h.b16 %v50
  %v375 = vunpack.c.l.b16 %v51
  %v376 = vunpack.c.h.b16 %v51
  %v377 = vunpack.c.l.b16 %v52
  %v378 = vunpack.c.h.b16 %v52
  %v379 = vunpack.c.l.b16 %v53
  %v380 = vunpack.c.h.b16 %v53
  %v381 = vunpack.c.l.b16 %v54
  %v382 = vunpack.c.h.b16 %v54
  %v383 = vunpack.c.l.b16 %v55
  %v384 = vunpack.c.h.b16 %v55
  %v385 = vunpack.c.l.b16 %v56
  %v386 = vunpack.c.h.b16 %v56
  %v387 = vunpack.c.l.b16 %v57
  %v388 = vunpack.c.h.b16 %v57
  %v389 = vunpack.c.l.b16 %v58
  %v390 = vunpack.c.h.b16 %v58
  %v391 = vunpack.c.l.b16 %v59
  %v392 = vunpack.c.h.b16 %v59
  %v393 = vunpack.c.l.b16 %v60
  %v394 = vunpack.c.h.b16 %v60
  %v395 = vunpack.c.l.b16 %v61
  %v396 = vunpack.c.h.b16 %v61
  %v397 = vunpack.c.l.b16 %v62
  %v398 = vunpack.c.h.b16 %v62
  %v399 = vunpack.c.l.b16 %v63
  %v400 = vunpack.c.h.b16 %v63
  %v401 = vunpack.c.l.b16 %v64
  %v402 = vunpack.c.h.b16 %v64
  %v403 = vunpack.c.l.b16 %v65
  %v404 = vunpack.c.h.b16 %v65
  %v405 = vunpack.c.l.b16 %v66
  %v406 = vunpack.c.h.b16 %v66
  %v407 = vunpack.c.l.b16 %v67
  %v408 = vunpack.c.h.b16 %v67
  %v409 = vunpack.c.l.b16 %v68
  %v410 = vunpack.c.h.b16 %v68
  %v411 = vunpack.c.l.b16 %v69
  %v412 = vunpack.c.h.b16 %v69
  %v413 = vunpack.c.l.b16 %v70
  %v414 = vunpack.c.h.b16 %v70
  %v415 = vunpack.c.l.b16 %v71
  %v416 = vunpack.c.h.b16 %v71
  %v417 = vunpack.c.l.b16 %v72
  %v418 = vunpack.c.h.b16 %v72
  %v419 = vunpack.c.l.b16 %v73
  %v420 = vunpack.c.h.b16 %v73
  %v421 = vunpack.c.l.b16 %v74
  %v422 = vunpack.c.h.b16 %v74
  %v423 = vunpack.c.l.b16 %v75
  %v424 = vunpack.c.h.b16 %v75
  %v425 = vunpack.c.l.b16 %v76
  %v426 = vunpack.c.h.b16 %v76
  %v427 = vunpack.c.l.b16 %v77
  %v428 = vunpack.c.h.b16 %v77
  %v429 = vunpack.c.l.b16 %v78
  %v430 = vunpack.c.h.b16 %v78
  %v431 = vunpack.c.l.b16 %v79
  %v432 = vunpack.c.h.b16 %v79
  %v433 = vunpack.c.l.b16 %v80
  %v434 = vunpack.c.h.b16 %v80
  %v435 = vunpack.c.l.b16 %v81
  %v436 = vunpack.c.h.b16 %v81
  %v437 = vunpack.c.l.b16 %v82
  %v438 = vunpack.c.h.b16 %v82
  %v439 = vunpack.c.l.b16 %v83
  %v440 = vunpack.c.h.b16 %v83
  %v441 = vunpack.c.l.b16 %v84
  %v442 = vunpack.c.h.b16 %v84
  %v443 = vunpack.c.l.b16 %v85
  %v444 = vunpack.c.h.b16 %v85
  %v445 = vunpack.c.l.b16 %v86
  %v446 = vunpack.c.h.b16 %v86
  %v447 = vunpack.c.l.b16 %v87
  %v448 = vunpack.c.h.b16 %v87
  %v449 = vunpack.c.l.b16 %v88
  %v450 = vunpack.c.h.b16 %v88
  %v451 = vunpack.c.l.b16 %v89
  %v452 = vunpack.c.h.b16 %v89
  %v453 = vunpack.c.l.b16 %v90
  %v454 = vunpack.c.h.b16 %v90
  %v455 = vunpack.c.l.b16 %v91
  %v456 = vunpack.c.h.b16 %v91
  %v457 = vunpack.c.l.b16 %v92
  %v458 = vunpack.c.h.b16 %v92
  %v459 = vunpack.c.l.b16 %v93
  %v460 = vunpack.c.h.b16 %v93
  %v461 = vunpack.c.l.b16 %v94
  %v462 = vunpack.c.h.b16 %v94
  %v463 = vunpack.c.l.b16 %v95
  %v464 = vunpack.c.h.b16 %v95
  %v465 = vunpack.c.l.b16 %v96
  %v466 = vunpack.c.h.b16 %v96
  %v467 = vunpack.c.l.b16 %v97
  %v468 = vunpack.c.h.b16 %v97
  %v469 = vunpack.c.l.b16 %v98
  %v470 = vunpack.c.h.b16 %v98
  %v471 = vunpack.c.l.b16 %v99
  %v472 = vunpack.c.h.b16 %v99
  %v473 = vunpack.c.l.b16 %v100
  %v474 = vunpack.c.h.b16 %v100
  %v475 = vunpack.c.l.b16 %v101
  %v476 = vunpack.c.h.b16 %v101
  %v477 = vunpack.c.l.b16 %v102
  %v478 = vunpack.c.h.b16 %v102
  %v479 = vunpack.c.l.b16 %v103
  %v480 = vunpack.c.h.b16 %v103
  %v481 = vunpack.c.l.b16 %v104
  %v482 = vunpack.c.h.b16 %v104
  %v483 = vunpack.c.l.b16 %v105
  %v484 = vunpack.c.h.b16 %v105
  %v485 = vunpack.c.l.b16 %v106
  %v486 = vunpack.c.h.b16 %v106
  %v487 = vunpack.c.l.b16 %v107
  %v488 = vunpack.c.h.b16 %v107
  %v489 = vunpack.c.l.b16 %v108
  %v490 = vunpack.c.h.b16 %v108
  %v491 = vunpack.c.l.b16 %v109
  %v492 = vunpack.c.h.b16 %v109
  %v493 = vunpack.c.l.b16 %v110
  %v494 = vunpack.c.h.b16 %v110
  %v495 = vunpack.c.l.b16 %v111
  %v496 = vunpack.c.h.b16 %v111
  %v497 = vunpack.c.l.b16 %v112
  %v498 = vunpack.c.h.b16 %v112
  %v499 = vunpack.c.l.b16 %v113
  %v500 = vunpack.c.h.b16 %v113
  %v501 = vunpack.c.l.b16 %v114
  %v502 = vunpack.c.h.b16 %v114
  %v503 = vunpack.c.l.b16 %v115
  %v504 = vunpack.c.h.b16 %v115
  %v505 = vunpack.c.l.b16 %v116
  %v506 = vunpack.c.h.b16 %v116
  %v507 = vunpack.c.l.b16 %v117
  %v508 = vunpack.c.h.b16 %v117
  %v509 = vunpack.c.l.b16 %v118
  %v510 = vunpack.c.h.b16 %v118
  %v511 = vunpack.c.l.b16 %v119
  %v512 = vunpack.c.h.b16 %v119
  %v513 = vunpack.c.l.b16 %v120
  %v514 = vunpack.c.h.b16 %v120
  %v515 = vunpack.c.l.b16 %v121
  %v516 = vunpack.c.h.b16 %v121
  %v517 = vunpack.c.l.b16 %v122
  %v518 = vunpack.c.h.b16 %v122
  %v519 = vunpack.c.l.b16 %v123
  %v520 = vunpack.c.h.b16 %v123
  %v521 = vunpack.c.l.b16 %v124
  %v522 = vunpack.c.h.b16 %v124
  %v523 = vunpack.c.l.b16 %v125
  %v524 = vunpack.c.h.b16 %v125
  %v525 = vunpack.c.l.b16 %v126
  %v526 = vunpack.c.h.b16 %v126
  %v527 = vunpack.c.l.b16 %v127
  %v528 = vunpack.c.h.b16 %v127
  %v529 = vunpack.c.l.b16 %v128
  %v530 = vunpack.c.h.b16 %v128
  %v531 = vunpack.c.l.b16 %v129
  %v532 = vunpack.c.h.b16 %v129
  %v533 = vunpack.c.l.b16 %v130
  %v534 = vunpack.c.h.b16 %v130
  %v535 = vunpack.c.l.b16 %v131
  %v536 = vunpack.c.h.b16 %v131
  %v537 = vunpack.c.l.b16 %v132
  %v538 = vunpack.c.h.b16 %v132
  %v539 = vunpack.c.l.b16 %v133
  %v540 = vunpack.c.h.b16 %v133
  %v541 = vunpack.c.l.b16 %v134
  %v542 = vunpack.c.h.b16 %v134
  %v543 = vunpack.c.l.b16 %v135
  %v544 = vunpack.c.h.b16 %v135
  %v545 = vunpack.c.l.b16 %v136
  %v546 = vunpack.c.h.b16 %v136
  %v547 = vunpack.c.l.b16 %v137
  %v548 = vunpack.c.h.b16 %v137
  %v549 = vunpack.c.l.b16 %v138
  %v550 = vunpack.c.h.b16 %v138
  %v551 = vunpack.c.l.b16 %v139
  %v552 = vunpack.c.h.b16 %v139
  %v553 = vunpack.c.l.b16 %v140
  %v554 = vunpack.c.h.b16 %v140
  %v555 = vunpack.c.l.b16 %v141
  %v556 = vunpack.c.h.b16 %v141
  %v557 = vunpack.c.l.b16 %v142
  %v558 = vunpack.c.h.b16 %v142
  %v559 = vpack.c.b16 %v305, %v303
  %v560 = vpack.c.b16 %v306, %v304
  %v561 = vpack.c.b16 %v309, %v307
  %v562 = vpack.c.b16 %v310, %v308
  %v563 = vpack.c.b16 %v313, %v311
  %v564 = vpack.c.b16 %v314, %v312
  %v565 = vpack.c.b16 %v317, %v315
  %v566 = vpack.c.b16 %v318, %v316
  %v567 = vpack.c.b16 %v321, %v319
  %v568 = vpack.c.b16 %v322, %v320
  %v569 = vpack.c.b16 %v325, %v323
  %v570 = vpack.c.b16 %v326, %v324
  %v571 = vpack.c.b16 %v329, %v327
  %v572 = vpack.c.b16 %v330, %v328
  %v573 = vpack.c.b16 %v333, %v331
  %v574 = vpack.c.b16 %v334, %v332
  %v575 = vpack.c.b16 %v337, %v335
  %v576 = vpack.c.b16 %v338, %v336
  %v577 = vpack.c.b16 %v341, %v339
  %v578 = vpack.c.b16 %v342, %v340
  %v579 = vpack.c.b16 %v345, %v343
  %v580 = vpack.c.b16 %v346, %v344
  %v581 = vpack.c.b16 %v349, %v347
  %v582 = vpack.c.b16 %v350, %v348
  %v583 = vpack.c.b16 %v353, %v351
  %v584 = vpack.c.b16 %v354, %v352
  %v585 = vpack.c.b16 %v357, %v355
  %v586 = vpack.c.b16 %v358, %v356
  %v587 = vpack.c.b16 %v361, %v359
  %v588 = vpack.c.b16 %v362, %v360
  %v589 = vpack.c.b16 %v365, %v363
  %v590 = vpack.c.b16 %v366, %v364
  %v591 = vpack.c.b16 %v369, %v367
  %v592 = vpack.c.b16 %v370, %v368
  %v593 = vpack.c.b16 %v373, %v371
  %v594 = vpack.c.b16 %v374, %v372
  %v595 = vpack.c.b16 %v377, %v375
  %v596 = vpack.c.b16 %v378, %v376
  %v597 = vpack.c.b16 %v381, %v379
  %v598 = vpack.c.b16 %v382, %v380
  %v599 = vpack.c.b16 %v385, %v383
  %v600 = vpack.c.b16 %v386, %v384
  %v601 = vpack.c.b16 %v389, %v387
  %v602 = vpack.c.b16 %v390, %v388
  %v603 = vpack.c.b16 %v393, %v391
  %v604 = vpack.c.b16 %v394, %v392
  %v605 = vpack.c.b16 %v397, %v395
  %v606 = vpack.c.b16 %v398, %v396
  %v607 = vpack.c.b16 %v401, %v399
  %v608 = vpack.c.b16 %v402, %v400
  %v609 = vpack.c.b16 %v405, %v403
  %v610 = vpack.c.b16 %v406, %v404
  %v611 = vpack.c.b16 %v409, %v407
  %v612 = vpack.c.b16 %v410, %v408
  %v613 = vpack.c.b16 %v413, %v411
  %v614 = vpack.c.b16 %v414, %v412
  %v615 = vpack.c.b16 %v417, %v415
  %v616 = vpack.c.b16 %v418, %v416
  %v617 = vpack.c.b16 %v421, %v419
  %v618 = vpack.c.b16 %v422, %v420
  %v619 = vpack.c.b16 %v425, %v423
  %v620 = vpack.c.b16 %v426, %v424
  %v621 = vpack.c.b16 %v429, %v427
  %v622 = vpack.c.b16 %v430, %v428
  %v623 = vpack.c.b16 %v433, %v431
  %v624 = vpack.c.b16 %v434, %v432
  %v625 = vpack.c.b16 %v437, %v435
  %v626 = vpack.c.b16 %v438, %v436
  %v627 = vpack.c.b16 %v441, %v439
  %v628 = vpack.c.b16 %v442, %v440
  %v629 = vpack.c.b16 %v445, %v443
  %v630 = vpack.c.b16 %v446, %v444
  %v631 = vpack.c.b16 %v449, %v447
  %v632 = vpack.c.b16 %v450, %v448
  %v633 = vpack.c.b16 %v453, %v451
  %v634 = vpack.c.b16 %v454, %v452
  %v635 = vpack.c.b16 %v457, %v455
  %v636 = vpack.c.b16 %v458, %v456
  %v637 = vpack.c.b16 %v461, %v459
  %v638 = vpack.c.b16 %v462, %v460
  %v639 = vpack.c.b16 %v465, %v463
  %v640 = vpack.c.b16 %v466, %v464
  %v641 = vpack.c.b16 %v469, %v467
  %v642 = vpack.c.b16 %v470, %v468
  %v643 = vpack.c.b16 %v473, %v471
  %v644 = vpack.c.b16 %v474, %v472
  %v645 = vpack.c.b16 %v477, %v475
  %v646 = vpack.c.b16 %v478, %v476
  %v647 = vpack.c.b16 %v481, %v479
  %v648 = vpack.c.b16 %v482, %v480
  %v649 = vpack.c.b16 %v485, %v483
  %v650 = vpack.c.b16 %v486, %v484
  %v651 = vpack.c.b16 %v489, %v487
  %v652 = vpack.c.b16 %v490, %v488
  %v653 = vpack.c.b16 %v493, %v491
  %v654 = vpack.c.b16 %v494, %v492
  %v655 = vpack.c.b16 %v497, %v495
  %v656 = vpack.c.b16 %v498, %v496
  %v657 = vpack.c.b16 %v501, %v499
  %v658 = vpack.c.b16 %v502, %v500
  %v659 = vpack.c.b16 %v505, %v503
  %v660 = vpack.c.b16 %v506, %v504
  %v661 = vpack.c.b16 %v509, %v507
  %v662 = vpack.c.b16 %v510, %v508
  %v663 = vpack.c.b16 %v513, %v511
  %v664 = vpack.c.b16 %v514, %v512
  %v665 = vpack.c.b16 %v517, %v515
  %v666 = vpack.c.b16 %v518, %v516
  %v667 = vpack.c.b16 %v521, %v519
  %v668 = vpack.c.b16 %v522, %v520
  %v669 = vpack.c.b16 %v525, %v523
  %v670 = vpack.c.b16 %v526, %v524
  %v671 = vpack.c.b16 %v529, %v527
  %v672 = vpack.c.b16 %v530, %v528
  %v673 = vpack.c.b16 %v533, %v531
  %v674 = vpack.c.b16 %v534, %v532
  %v675 = vpack.c.b16 %v537, %v535
  %v676 = vpack.c.b16 %v538, %v536
  %v677 = vpack.c.b16 %v541, %v539
  %v678 = vpack.c.b16 %v542, %v540
  %v679 = vpack.c.b16 %v545, %v543
  %v680 = vpack.c.b16 %v546, %v544
  %v681 = vpack.c.b16 %v549, %v547
  %v682 = vpack.c.b16 %v550, %v548
  %v683 = vpack.c.b16 %v553, %v551
  %v684 = vpack.c.b16 %v554, %v552
  %v685 = vpack.c.b16 %v557, %v555
  %v686 = vpack.c.b16 %v558, %v556
  %v776 = vunpack.c.l.b16 %v143
  %v777 = vunpack.c.l.b16 %v144
  %v778 = vunpack.c.l.b16 %v145
  %v779 = vunpack.c.l.b16 %v146
  %v780 = vunpack.c.l.b16 %v147
  %v781 = vunpack.c.l.b16 %v148
  %v782 = vunpack.c.l.b16 %v149
  %v783 = vunpack.c.l.b16 %v150
  %v784 = vunpack.c.l.b16 %v151
  %v785 = vunpack.c.l.b16 %v152
  %v786 = vunpack.c.l.b16 %v153
  %v787 = vunpack.c.l.b16 %v154
  %v788 = vunpack.c.l.b16 %v155
  %v789 = vunpack.c.l.b16 %v156
  %v790 = vunpack.c.l.b16 %v157
  %v791 = vunpack.c.l.b16 %v158
  %v792 = vunpack.c.l.b16 %v159
  %v793 = vunpack.c.l.b16 %v160
  %v794 = vunpack.c.l.b16 %v161
  %v795 = vunpack.c.l.b16 %v162
  %v796 = vunpack.c.l.b16 %v163
  %v797 = vunpack.c.l.b16 %v164
  %v798 = vunpack.c.l.b16 %v165
  %v799 = vunpack.c.l.b16 %v166
  %v800 = vunpack.c.l.b16 %v167
  %v801 = vpack.c.b16 %v777, %v776
  %v802 = vpack.c.b16 %v779, %v778
  %v803 = vpack.c.b16 %v781, %v780
  %v804 = vpack.c.b16 %v783, %v782
  %v805 = vpack.c.b16 %v785, %v784
  %v806 = vpack.c.b16 %v787, %v786
  %v807 = vpack.c.b16 %v789, %v788
  %v808 = vpack.c.b16 %v791, %v790
  %v809 = vpack.c.b16 %v793, %v792
  %v810 = vpack.c.b16 %v795, %v794
  %v811 = vpack.c.b16 %v797, %v796
  %v812 = vpack.c.b16 %v799, %v798
  %v813 = vpack.c.b16 %v800, %v800
  %vm826 = vcmask 556032
  %v828 = vsel %vm826, %v560, 0
  %v831 = vsel %vm826, %v562, 0
  %v834 = vsel %vm826, %v564, 0
  %v837 = vsel %vm826, %v566, 0
  %v840 = vsel %vm826, %v568, 0
  %v843 = vsel %vm826, %v570, 0
  %v846 = vsel %vm826, %v572, 0
  %v849 = vsel %vm826, %v574, 0
  %v852 = vsel %vm826, %v576, 0
  %v855 = vsel %vm826, %v578, 0
  %v858 = vsel %vm826, %v580, 0
  %v861 = vsel %vm826, %v582, 0
  %v864 = vsel %vm826, %v584, 0
  %v867 = vsel %vm826, %v586, 0
  %v870 = vsel %vm826, %v588, 0
  %v873 = vsel %vm826, %v590, 0
  %v876 = vsel %vm826, %v592, 0
  %v879 = vsel %vm826, %v594, 0
  %v882 = vsel %vm826, %v596, 0
  %v885 = vsel %vm826, %v598, 0
  %v888 = vsel %vm826, %v600, 0
  %v891 = vsel %vm826, %v602, 0
  %v894 = vsel %vm826, %v604, 0
  %v897 = vsel %vm826, %v606, 0
  %v900 = vsel %vm826, %v608, 0
  %v903 = vsel %vm826, %v610, 0
  %v906 = vsel %vm826, %v612, 0
  %v909 = vsel %vm826, %v614, 0
  %v912 = vsel %vm826, %v616, 0
  %v915 = vsel %vm826, %v618, 0
  %v918 = vsel %vm826, %v620, 0
  %v921 = vsel %vm826, %v622, 0
  %v924 = vsel %vm826, %v624, 0
  %v927 = vsel %vm826, %v626, 0
  %v930 = vsel %vm826, %v628, 0
  %v933 = vsel %vm826, %v630, 0
  %v936 = vsel %vm826, %v632, 0
  %v939 = vsel %vm826, %v634, 0
  %v942 = vsel %vm826, %v636, 0
  %v945 = vsel %vm826, %v638, 0
  %v948 = vsel %vm826, %v640, 0
  %v951 = vsel %vm826, %v642, 0
  %v954 = vsel %vm826, %v644, 0
  %v957 = vsel %vm826, %v646, 0
  %v960 = vsel %vm826, %v648, 0
  %v963 = vsel %vm826, %v650, 0
  %v966 = vsel %vm826, %v652, 0
  %v969 = vsel %vm826, %v654, 0
  %v972 = vsel %vm826, %v656, 0
  %v975 = vsel %vm826, %v658, 0
  %v978 = vsel %vm826, %v660, 0
  %v981 = vsel %vm826, %v662, 0
  %v984 = vsel %vm826, %v664, 0
  %v987 = vsel %vm826, %v666, 0
  %v990 = vsel %vm826, %v668, 0
  %v993 = vsel %vm826, %v670, 0
  %v996 = vsel %vm826, %v672, 0
  %v999 = vsel %vm826, %v674, 0
  %v1002 = vsel %vm826, %v676, 0
  %v1005 = vsel %vm826, %v678, 0
  %v1008 = vsel %vm826, %v680, 0
  %v1011 = vsel %vm826, %v682, 0
  %v1014 = vsel %vm826, %v684, 0
  %v1017 = vsel %vm826, %v686, 0
  %vm1019 = vcmask 1041408
  %v1021 = vsel %vm1019, %v813, 0
  %1023 = vmatprep.subr.bf16.mxu0 0
  %1024 = vmatpush1.bf16.msra.mxu0 %v801
  %1025 = vmatprep.subr.bf16.mxu0 0
  %1026 = vmatpush1.bf16.msra.mxu0 %v802
  %1027 = vmatprep.subr.bf16.mxu0 0
  %1028 = vmatpush1.bf16.msra.mxu0 %v803
  %1029 = vmatprep.subr.bf16.mxu0 0
  %1030 = vmatpush1.bf16.msra.mxu0 %v804
  %1031 = vmatprep.subr.bf16.mxu0 0
  %1032 = vmatpush1.bf16.msra.mxu0 %v805
  %1033 = vmatprep.subr.bf16.mxu0 0
  %1034 = vmatpush1.bf16.msra.mxu0 %v806
  %1035 = vmatprep.subr.bf16.mxu0 0
  %1036 = vmatpush1.bf16.msra.mxu0 %v807
  %1037 = vmatprep.subr.bf16.mxu0 0
  %1038 = vmatpush1.bf16.msra.mxu0 %v808
  %1039 = vmatprep.subr.bf16.mxu0 0
  %1040 = vmatpush1.bf16.msra.mxu0 %v809
  %1041 = vmatprep.subr.bf16.mxu0 0
  %1042 = vmatpush1.bf16.msra.mxu0 %v810
  %1043 = vmatprep.subr.bf16.mxu0 0
  %1044 = vmatpush1.bf16.msra.mxu0 %v811
  %1045 = vmatprep.subr.bf16.mxu0 0
  %1046 = vmatpush1.bf16.msra.mxu0 %v812
  %1047 = vmatprep.subr.bf16.mxu0 0
  %1048 = vmatpush1.bf16.msra.mxu0 %v1021
  %1049 = vmatprep.subr.bf16.mxu0 0
  %1050 = vmatpush1.bf16.msra.mxu0 0
  %1051 = vmatprep.subr.bf16.mxu0 0
  %1052 = vmatpush1.bf16.msra.mxu0 0
  %1053 = vmatprep.subr.bf16.mxu0 0
  %1054 = vmatpush1.bf16.msra.mxu0 0
  %1055 = vmatprep.mubr.bf16.mxu0 %v828
  %1056 = vmatmul.mubr.bf16.gmra.mrb[0].mxu0 %v559
  %v1057 = vpop.f32.mrb[0].mxu0
  %v1058 = vadd.f32 %v173, %v1057
  %v1059 = vpop.f32.mrb[0].mxu0
  %v1060 = vpop.f32.mrb[0].mxu0
  %v1061 = vadd.f32 %v173, %v1060
  %v1062 = vpop.f32.mrb[0].mxu0
  %1063 = vmatprep.mubr.bf16.mxu0 %v831
  %1064 = vmatmul.mubr.bf16.gmra.mrb[0].mxu0 %v561
  %v1065 = vpop.f32.mrb[0].mxu0
  %v1066 = vadd.f32 %v173, %v1065
  %v1067 = vpop.f32.mrb[0].mxu0
  %v1068 = vpop.f32.mrb[0].mxu0
  %v1069 = vadd.f32 %v173, %v1068
  %v1070 = vpop.f32.mrb[0].mxu0
  %1071 = vmatprep.mubr.bf16.mxu0 %v834
  %1072 = vmatmul.mubr.bf16.gmra.mrb[0].mxu0 %v563
  %v1073 = vpop.f32.mrb[0].mxu0
  %v1074 = vadd.f32 %v173, %v1073
  %v1075 = vpop.f32.mrb[0].mxu0
  %v1076 = vpop.f32.mrb[0].mxu0
  %v1077 = vadd.f32 %v173, %v1076
  %v1078 = vpop.f32.mrb[0].mxu0
  %1079 = vmatprep.mubr.bf16.mxu0 %v837
  %1080 = vmatmul.mubr.bf16.gmra.mrb[0].mxu0 %v565
  %v1081 = vpop.f32.mrb[0].mxu0
  %v1082 = vadd.f32 %v173, %v1081
  %v1083 = vpop.f32.mrb[0].mxu0
  %v1084 = vpop.f32.mrb[0].mxu0
  %v1085 = vadd.f32 %v173, %v1084
  %v1086 = vpop.f32.mrb[0].mxu0
  %1087 = vmatprep.mubr.bf16.mxu0 %v840
  %1088 = vmatmul.mubr.bf16.gmra.mrb[0].mxu0 %v567
  %v1089 = vpop.f32.mrb[0].mxu0
  %v1090 = vadd.f32 %v173, %v1089
  %v1091 = vpop.f32.mrb[0].mxu0
  %v1092 = vpop.f32.mrb[0].mxu0
  %v1093 = vadd.f32 %v173, %v1092
  %v1094 = vpop.f32.mrb[0].mxu0
  %1095 = vmatprep.mubr.bf16.mxu0 %v843
  %1096 = vmatmul.mubr.bf16.gmra.mrb[0].mxu0 %v569
  %v1097 = vpop.f32.mrb[0].mxu0
  %v1098 = vadd.f32 %v173, %v1097
  %v1099 = vpop.f32.mrb[0].mxu0
  %v1100 = vpop.f32.mrb[0].mxu0
  %v1101 = vadd.f32 %v173, %v1100
  %v1102 = vpop.f32.mrb[0].mxu0
  %1103 = vmatprep.mubr.bf16.mxu0 %v846
  %1104 = vmatmul.mubr.bf16.gmra.mrb[0].mxu0 %v571
  %v1105 = vpop.f32.mrb[0].mxu0
  %v1106 = vadd.f32 %v173, %v1105
  %v1107 = vpop.f32.mrb[0].mxu0
  %v1108 = vpop.f32.mrb[0].mxu0
  %v1109 = vadd.f32 %v173, %v1108
  %v1110 = vpop.f32.mrb[0].mxu0
  %1111 = vmatprep.mubr.bf16.mxu0 %v849
  %1112 = vmatmul.mubr.bf16.gmra.mrb[0].mxu0 %v573
  %v1113 = vpop.f32.mrb[0].mxu0
  %v1114 = vadd.f32 %v173, %v1113
  %v1115 = vpop.f32.mrb[0].mxu0
  %v1116 = vpop.f32.mrb[0].mxu0
  %v1117 = vadd.f32 %v173, %v1116
  %v1118 = vpop.f32.mrb[0].mxu0
  %1119 = vmatprep.mubr.bf16.mxu0 %v852
  %1120 = vmatmul.mubr.bf16.gmra.mrb[0].mxu0 %v575
  %v1121 = vpop.f32.mrb[0].mxu0
  %v1122 = vadd.f32 %v173, %v1121
  %v1123 = vpop.f32.mrb[0].mxu0
  %v1124 = vpop.f32.mrb[0].mxu0
  %v1125 = vadd.f32 %v173, %v1124
  %v1126 = vpop.f32.mrb[0].mxu0
  %1127 = vmatprep.mubr.bf16.mxu0 %v855
  %1128 = vmatmul.mubr.bf16.gmra.mrb[0].mxu0 %v577
  %v1129 = vpop.f32.mrb[0].mxu0
  %v1130 = vadd.f32 %v173, %v1129
  %v1131 = vpop.f32.mrb[0].mxu0
  %v1132 = vpop.f32.mrb[0].mxu0
  %v1133 = vadd.f32 %v173, %v1132
  %v1134 = vpop.f32.mrb[0].mxu0
  %1135 = vmatprep.mubr.bf16.mxu0 %v858
  %1136 = vmatmul.mubr.bf16.gmra.mrb[0].mxu0 %v579
  %v1137 = vpop.f32.mrb[0].mxu0
  %v1138 = vadd.f32 %v173, %v1137
  %v1139 = vpop.f32.mrb[0].mxu0
  %v1140 = vpop.f32.mrb[0].mxu0
  %v1141 = vadd.f32 %v173, %v1140
  %v1142 = vpop.f32.mrb[0].mxu0
  %1143 = vmatprep.mubr.bf16.mxu0 %v861
  %1144 = vmatmul.mubr.bf16.gmra.mrb[0].mxu0 %v581
  %v1145 = vpop.f32.mrb[0].mxu0
  %v1146 = vadd.f32 %v173, %v1145
  %v1147 = vpop.f32.mrb[0].mxu0
  %v1148 = vpop.f32.mrb[0].mxu0
  %v1149 = vadd.f32 %v173, %v1148
  %v1150 = vpop.f32.mrb[0].mxu0
  %1151 = vmatprep.mubr.bf16.mxu0 %v864
  %1152 = vmatmul.mubr.bf16.gmra.mrb[0].mxu0 %v583
  %v1153 = vpop.f32.mrb[0].mxu0
  %v1154 = vadd.f32 %v173, %v1153
  %v1155 = vpop.f32.mrb[0].mxu0
  %v1156 = vpop.f32.mrb[0].mxu0
  %v1157 = vadd.f32 %v173, %v1156
  %v1158 = vpop.f32.mrb[0].mxu0
  %1159 = vmatprep.mubr.bf16.mxu0 %v867
  %1160 = vmatmul.mubr.bf16.gmra.mrb[0].mxu0 %v585
  %v1161 = vpop.f32.mrb[0].mxu0
  %v1162 = vadd.f32 %v173, %v1161
  %v1163 = vpop.f32.mrb[0].mxu0
  %v1164 = vpop.f32.mrb[0].mxu0
  %v1165 = vadd.f32 %v173, %v1164
  %v1166 = vpop.f32.mrb[0].mxu0
  %1167 = vmatprep.mubr.bf16.mxu0 %v870
  %1168 = vmatmul.mubr.bf16.gmra.mrb[0].mxu0 %v587
  %v1169 = vpop.f32.mrb[0].mxu0
  %v1170 = vadd.f32 %v173, %v1169
  %v1171 = vpop.f32.mrb[0].mxu0
  %v1172 = vpop.f32.mrb[0].mxu0
  %v1173 = vadd.f32 %v173, %v1172
  %v1174 = vpop.f32.mrb[0].mxu0
  %1175 = vmatprep.mubr.bf16.mxu0 %v873
  %1176 = vmatmul.mubr.bf16.gmra.mrb[0].mxu0 %v589
  %v1177 = vpop.f32.mrb[0].mxu0
  %v1178 = vadd.f32 %v173, %v1177
  %v1179 = vpop.f32.mrb[0].mxu0
  %v1180 = vpop.f32.mrb[0].mxu0
  %v1181 = vadd.f32 %v173, %v1180
  %v1182 = vpop.f32.mrb[0].mxu0
  %1183 = vmatprep.mubr.bf16.mxu0 %v876
  %1184 = vmatmul.mubr.bf16.gmra.mrb[0].mxu0 %v591
  %v1185 = vpop.f32.mrb[0].mxu0
  %v1186 = vadd.f32 %v173, %v1185
  %v1187 = vpop.f32.mrb[0].mxu0
  %v1188 = vpop.f32.mrb[0].mxu0
  %v1189 = vadd.f32 %v173, %v1188
  %v1190 = vpop.f32.mrb[0].mxu0
  %1191 = vmatprep.mubr.bf16.mxu0 %v879
  %1192 = vmatmul.mubr.bf16.gmra.mrb[0].mxu0 %v593
  %v1193 = vpop.f32.mrb[0].mxu0
  %v1194 = vadd.f32 %v173, %v1193
  %v1195 = vpop.f32.mrb[0].mxu0
  %v1196 = vpop.f32.mrb[0].mxu0
  %v1197 = vadd.f32 %v173, %v1196
  %v1198 = vpop.f32.mrb[0].mxu0
  %1199 = vmatprep.mubr.bf16.mxu0 %v882
  %1200 = vmatmul.mubr.bf16.gmra.mrb[0].mxu0 %v595
  %v1201 = vpop.f32.mrb[0].mxu0
  %v1202 = vadd.f32 %v173, %v1201
  %v1203 = vpop.f32.mrb[0].mxu0
  %v1204 = vpop.f32.mrb[0].mxu0
  %v1205 = vadd.f32 %v173, %v1204
  %v1206 = vpop.f32.mrb[0].mxu0
  %1207 = vmatprep.mubr.bf16.mxu0 %v885
  %1208 = vmatmul.mubr.bf16.gmra.mrb[0].mxu0 %v597
  %v1209 = vpop.f32.mrb[0].mxu0
  %v1210 = vadd.f32 %v173, %v1209
  %v1211 = vpop.f32.mrb[0].mxu0
  %v1212 = vpop.f32.mrb[0].mxu0
  %v1213 = vadd.f32 %v173, %v1212
  %v1214 = vpop.f32.mrb[0].mxu0
  %1215 = vmatprep.mubr.bf16.mxu0 %v888
  %1216 = vmatmul.mubr.bf16.gmra.mrb[0].mxu0 %v599
  %v1217 = vpop.f32.mrb[0].mxu0
  %v1218 = vadd.f32 %v173, %v1217
  %v1219 = vpop.f32.mrb[0].mxu0
  %v1220 = vpop.f32.mrb[0].mxu0
  %v1221 = vadd.f32 %v173, %v1220
  %v1222 = vpop.f32.mrb[0].mxu0
  %1223 = vmatprep.mubr.bf16.mxu0 %v891
  %1224 = vmatmul.mubr.bf16.gmra.mrb[0].mxu0 %v601
  %v1225 = vpop.f32.mrb[0].mxu0
  %v1226 = vadd.f32 %v173, %v1225
  %v1227 = vpop.f32.mrb[0].mxu0
  %v1228 = vpop.f32.mrb[0].mxu0
  %v1229 = vadd.f32 %v173, %v1228
  %v1230 = vpop.f32.mrb[0].mxu0
  %1231 = vmatprep.mubr.bf16.mxu0 %v894
  %1232 = vmatmul.mubr.bf16.gmra.mrb[0].mxu0 %v603
  %v1233 = vpop.f32.mrb[0].mxu0
  %v1234 = vadd.f32 %v173, %v1233
  %v1235 = vpop.f32.mrb[0].mxu0
  %v1236 = vpop.f32.mrb[0].mxu0
  %v1237 = vadd.f32 %v173, %v1236
  %v1238 = vpop.f32.mrb[0].mxu0
  %1239 = vmatprep.mubr.bf16.mxu0 %v897
  %1240 = vmatmul.mubr.bf16.gmra.mrb[0].mxu0 %v605
  %v1241 = vpop.f32.mrb[0].mxu0
  %v1242 = vadd.f32 %v173, %v1241
  %v1243 = vpop.f32.mrb[0].mxu0
  %v1244 = vpop.f32.mrb[0].mxu0
  %v1245 = vadd.f32 %v173, %v1244
  %v1246 = vpop.f32.mrb[0].mxu0
  %1247 = vmatprep.mubr.bf16.mxu0 %v900
  %1248 = vmatmul.mubr.bf16.gmra.mrb[0].mxu0 %v607
  %v1249 = vpop.f32.mrb[0].mxu0
  %v1250 = vadd.f32 %v173, %v1249
  %v1251 = vpop.f32.mrb[0].mxu0
  %v1252 = vpop.f32.mrb[0].mxu0
  %v1253 = vadd.f32 %v173, %v1252
  %v1254 = vpop.f32.mrb[0].mxu0
  %1255 = vmatprep.mubr.bf16.mxu0 %v903
  %1256 = vmatmul.mubr.bf16.gmra.mrb[0].mxu0 %v609
  %v1257 = vpop.f32.mrb[0].mxu0
  %v1258 = vadd.f32 %v173, %v1257
  %v1259 = vpop.f32.mrb[0].mxu0
  %v1260 = vpop.f32.mrb[0].mxu0
  %v1261 = vadd.f32 %v173, %v1260
  %v1262 = vpop.f32.mrb[0].mxu0
  %1263 = vmatprep.mubr.bf16.mxu0 %v906
  %1264 = vmatmul.mubr.bf16.gmra.mrb[0].mxu0 %v611
  %v1265 = vpop.f32.mrb[0].mxu0
  %v1266 = vadd.f32 %v173, %v1265
  %v1267 = vpop.f32.mrb[0].mxu0
  %v1268 = vpop.f32.mrb[0].mxu0
  %v1269 = vadd.f32 %v173, %v1268
  %v1270 = vpop.f32.mrb[0].mxu0
  %1271 = vmatprep.mubr.bf16.mxu0 %v909
  %1272 = vmatmul.mubr.bf16.gmra.mrb[0].mxu0 %v613
  %v1273 = vpop.f32.mrb[0].mxu0
  %v1274 = vadd.f32 %v173, %v1273
  %v1275 = vpop.f32.mrb[0].mxu0
  %v1276 = vpop.f32.mrb[0].mxu0
  %v1277 = vadd.f32 %v173, %v1276
  %v1278 = vpop.f32.mrb[0].mxu0
  %1279 = vmatprep.mubr.bf16.mxu0 %v912
  %1280 = vmatmul.mubr.bf16.gmra.mrb[0].mxu0 %v615
  %v1281 = vpop.f32.mrb[0].mxu0
  %v1282 = vadd.f32 %v173, %v1281
  %v1283 = vpop.f32.mrb[0].mxu0
  %v1284 = vpop.f32.mrb[0].mxu0
  %v1285 = vadd.f32 %v173, %v1284
  %v1286 = vpop.f32.mrb[0].mxu0
  %1287 = vmatprep.mubr.bf16.mxu0 %v915
  %1288 = vmatmul.mubr.bf16.gmra.mrb[0].mxu0 %v617
  %v1289 = vpop.f32.mrb[0].mxu0
  %v1290 = vadd.f32 %v173, %v1289
  %v1291 = vpop.f32.mrb[0].mxu0
  %v1292 = vpop.f32.mrb[0].mxu0
  %v1293 = vadd.f32 %v173, %v1292
  %v1294 = vpop.f32.mrb[0].mxu0
  %1295 = vmatprep.mubr.bf16.mxu0 %v918
  %1296 = vmatmul.mubr.bf16.gmra.mrb[0].mxu0 %v619
  %v1297 = vpop.f32.mrb[0].mxu0
  %v1298 = vadd.f32 %v173, %v1297
  %v1299 = vpop.f32.mrb[0].mxu0
  %v1300 = vpop.f32.mrb[0].mxu0
  %v1301 = vadd.f32 %v173, %v1300
  %v1302 = vpop.f32.mrb[0].mxu0
  %1303 = vmatprep.mubr.bf16.mxu0 %v921
  %1304 = vmatmul.mubr.bf16.gmra.mrb[0].mxu0 %v621
  %v1305 = vpop.f32.mrb[0].mxu0
  %v1306 = vadd.f32 %v173, %v1305
  %v1307 = vpop.f32.mrb[0].mxu0
  %v1308 = vpop.f32.mrb[0].mxu0
  %v1309 = vadd.f32 %v173, %v1308
  %v1310 = vpop.f32.mrb[0].mxu0
  %1311 = vmatprep.mubr.bf16.mxu0 %v924
  %1312 = vmatmul.mubr.bf16.gmra.mrb[0].mxu0 %v623
  %v1313 = vpop.f32.mrb[0].mxu0
  %v1314 = vadd.f32 %v173, %v1313
  %v1315 = vpop.f32.mrb[0].mxu0
  %v1316 = vpop.f32.mrb[0].mxu0
  %v1317 = vadd.f32 %v173, %v1316
  %v1318 = vpop.f32.mrb[0].mxu0
  %1319 = vmatprep.mubr.bf16.mxu0 %v927
  %1320 = vmatmul.mubr.bf16.gmra.mrb[0].mxu0 %v625
  %v1321 = vpop.f32.mrb[0].mxu0
  %v1322 = vadd.f32 %v173, %v1321
  %v1323 = vpop.f32.mrb[0].mxu0
  %v1324 = vpop.f32.mrb[0].mxu0
  %v1325 = vadd.f32 %v173, %v1324
  %v1326 = vpop.f32.mrb[0].mxu0
  %1327 = vmatprep.mubr.bf16.mxu0 %v930
  %1328 = vmatmul.mubr.bf16.gmra.mrb[0].mxu0 %v627
  %v1329 = vpop.f32.mrb[0].mxu0
  %v1330 = vadd.f32 %v173, %v1329
  %v1331 = vpop.f32.mrb[0].mxu0
  %v1332 = vpop.f32.mrb[0].mxu0
  %v1333 = vadd.f32 %v173, %v1332
  %v1334 = vpop.f32.mrb[0].mxu0
  %1335 = vmatprep.mubr.bf16.mxu0 %v933
  %1336 = vmatmul.mubr.bf16.gmra.mrb[0].mxu0 %v629
  %v1337 = vpop.f32.mrb[0].mxu0
  %v1338 = vadd.f32 %v173, %v1337
  %v1339 = vpop.f32.mrb[0].mxu0
  %v1340 = vpop.f32.mrb[0].mxu0
  %v1341 = vadd.f32 %v173, %v1340
  %v1342 = vpop.f32.mrb[0].mxu0
  %1343 = vmatprep.mubr.bf16.mxu0 %v936
  %1344 = vmatmul.mubr.bf16.gmra.mrb[0].mxu0 %v631
  %v1345 = vpop.f32.mrb[0].mxu0
  %v1346 = vadd.f32 %v173, %v1345
  %v1347 = vpop.f32.mrb[0].mxu0
  %v1348 = vpop.f32.mrb[0].mxu0
  %v1349 = vadd.f32 %v173, %v1348
  %v1350 = vpop.f32.mrb[0].mxu0
  %1351 = vmatprep.mubr.bf16.mxu0 %v939
  %1352 = vmatmul.mubr.bf16.gmra.mrb[0].mxu0 %v633
  %v1353 = vpop.f32.mrb[0].mxu0
  %v1354 = vadd.f32 %v173, %v1353
  %v1355 = vpop.f32.mrb[0].mxu0
  %v1356 = vpop.f32.mrb[0].mxu0
  %v1357 = vadd.f32 %v173, %v1356
  %v1358 = vpop.f32.mrb[0].mxu0
  %1359 = vmatprep.mubr.bf16.mxu0 %v942
  %1360 = vmatmul.mubr.bf16.gmra.mrb[0].mxu0 %v635
  %v1361 = vpop.f32.mrb[0].mxu0
  %v1362 = vadd.f32 %v173, %v1361
  %v1363 = vpop.f32.mrb[0].mxu0
  %v1364 = vpop.f32.mrb[0].mxu0
  %v1365 = vadd.f32 %v173, %v1364
  %v1366 = vpop.f32.mrb[0].mxu0
  %1367 = vmatprep.mubr.bf16.mxu0 %v945
  %1368 = vmatmul.mubr.bf16.gmra.mrb[0].mxu0 %v637
  %v1369 = vpop.f32.mrb[0].mxu0
  %v1370 = vadd.f32 %v173, %v1369
  %v1371 = vpop.f32.mrb[0].mxu0
  %v1372 = vpop.f32.mrb[0].mxu0
  %v1373 = vadd.f32 %v173, %v1372
  %v1374 = vpop.f32.mrb[0].mxu0
  %1375 = vmatprep.mubr.bf16.mxu0 %v948
  %1376 = vmatmul.mubr.bf16.gmra.mrb[0].mxu0 %v639
  %v1377 = vpop.f32.mrb[0].mxu0
  %v1378 = vadd.f32 %v173, %v1377
  %v1379 = vpop.f32.mrb[0].mxu0
  %v1380 = vpop.f32.mrb[0].mxu0
  %v1381 = vadd.f32 %v173, %v1380
  %v1382 = vpop.f32.mrb[0].mxu0
  %1383 = vmatprep.mubr.bf16.mxu0 %v951
  %1384 = vmatmul.mubr.bf16.gmra.mrb[0].mxu0 %v641
  %v1385 = vpop.f32.mrb[0].mxu0
  %v1386 = vadd.f32 %v173, %v1385
  %v1387 = vpop.f32.mrb[0].mxu0
  %v1388 = vpop.f32.mrb[0].mxu0
  %v1389 = vadd.f32 %v173, %v1388
  %v1390 = vpop.f32.mrb[0].mxu0
  %1391 = vmatprep.mubr.bf16.mxu0 %v954
  %1392 = vmatmul.mubr.bf16.gmra.mrb[0].mxu0 %v643
  %v1393 = vpop.f32.mrb[0].mxu0
  %v1394 = vadd.f32 %v173, %v1393
  %v1395 = vpop.f32.mrb[0].mxu0
  %v1396 = vpop.f32.mrb[0].mxu0
  %v1397 = vadd.f32 %v173, %v1396
  %v1398 = vpop.f32.mrb[0].mxu0
  %1399 = vmatprep.mubr.bf16.mxu0 %v957
  %1400 = vmatmul.mubr.bf16.gmra.mrb[0].mxu0 %v645
  %v1401 = vpop.f32.mrb[0].mxu0
  %v1402 = vadd.f32 %v173, %v1401
  %v1403 = vpop.f32.mrb[0].mxu0
  %v1404 = vpop.f32.mrb[0].mxu0
  %v1405 = vadd.f32 %v173, %v1404
  %v1406 = vpop.f32.mrb[0].mxu0
  %1407 = vmatprep.mubr.bf16.mxu0 %v960
  %1408 = vmatmul.mubr.bf16.gmra.mrb[0].mxu0 %v647
  %v1409 = vpop.f32.mrb[0].mxu0
  %v1410 = vadd.f32 %v173, %v1409
  %v1411 = vpop.f32.mrb[0].mxu0
  %v1412 = vpop.f32.mrb[0].mxu0
  %v1413 = vadd.f32 %v173, %v1412
  %v1414 = vpop.f32.mrb[0].mxu0
  %1415 = vmatprep.mubr.bf16.mxu0 %v963
  %1416 = vmatmul.mubr.bf16.gmra.mrb[0].mxu0 %v649
  %v1417 = vpop.f32.mrb[0].mxu0
  %v1418 = vadd.f32 %v173, %v1417
  %v1419 = vpop.f32.mrb[0].mxu0
  %v1420 = vpop.f32.mrb[0].mxu0
  %v1421 = vadd.f32 %v173, %v1420
  %v1422 = vpop.f32.mrb[0].mxu0
  %1423 = vmatprep.mubr.bf16.mxu0 %v966
  %1424 = vmatmul.mubr.bf16.gmra.mrb[0].mxu0 %v651
  %v1425 = vpop.f32.mrb[0].mxu0
  %v1426 = vadd.f32 %v173, %v1425
  %v1427 = vpop.f32.mrb[0].mxu0
  %v1428 = vpop.f32.mrb[0].mxu0
  %v1429 = vadd.f32 %v173, %v1428
  %v1430 = vpop.f32.mrb[0].mxu0
  %1431 = vmatprep.mubr.bf16.mxu0 %v969
  %1432 = vmatmul.mubr.bf16.gmra.mrb[0].mxu0 %v653
  %v1433 = vpop.f32.mrb[0].mxu0
  %v1434 = vadd.f32 %v173, %v1433
  %v1435 = vpop.f32.mrb[0].mxu0
  %v1436 = vpop.f32.mrb[0].mxu0
  %v1437 = vadd.f32 %v173, %v1436
  %v1438 = vpop.f32.mrb[0].mxu0
  %1439 = vmatprep.mubr.bf16.mxu0 %v972
  %1440 = vmatmul.mubr.bf16.gmra.mrb[0].mxu0 %v655
  %v1441 = vpop.f32.mrb[0].mxu0
  %v1442 = vadd.f32 %v173, %v1441
  %v1443 = vpop.f32.mrb[0].mxu0
  %v1444 = vpop.f32.mrb[0].mxu0
  %v1445 = vadd.f32 %v173, %v1444
  %v1446 = vpop.f32.mrb[0].mxu0
  %1447 = vmatprep.mubr.bf16.mxu0 %v975
  %1448 = vmatmul.mubr.bf16.gmra.mrb[0].mxu0 %v657
  %v1449 = vpop.f32.mrb[0].mxu0
  %v1450 = vadd.f32 %v173, %v1449
  %v1451 = vpop.f32.mrb[0].mxu0
  %v1452 = vpop.f32.mrb[0].mxu0
  %v1453 = vadd.f32 %v173, %v1452
  %v1454 = vpop.f32.mrb[0].mxu0
  %1455 = vmatprep.mubr.bf16.mxu0 %v978
  %1456 = vmatmul.mubr.bf16.gmra.mrb[0].mxu0 %v659
  %v1457 = vpop.f32.mrb[0].mxu0
  %v1458 = vadd.f32 %v173, %v1457
  %v1459 = vpop.f32.mrb[0].mxu0
  %v1460 = vpop.f32.mrb[0].mxu0
  %v1461 = vadd.f32 %v173, %v1460
  %v1462 = vpop.f32.mrb[0].mxu0
  %1463 = vmatprep.mubr.bf16.mxu0 %v981
  %1464 = vmatmul.mubr.bf16.gmra.mrb[0].mxu0 %v661
  %v1465 = vpop.f32.mrb[0].mxu0
  %v1466 = vadd.f32 %v173, %v1465
  %v1467 = vpop.f32.mrb[0].mxu0
  %v1468 = vpop.f32.mrb[0].mxu0
  %v1469 = vadd.f32 %v173, %v1468
  %v1470 = vpop.f32.mrb[0].mxu0
  %1471 = vmatprep.mubr.bf16.mxu0 %v984
  %1472 = vmatmul.mubr.bf16.gmra.mrb[0].mxu0 %v663
  %v1473 = vpop.f32.mrb[0].mxu0
  %v1474 = vadd.f32 %v173, %v1473
  %v1475 = vpop.f32.mrb[0].mxu0
  %v1476 = vpop.f32.mrb[0].mxu0
  %v1477 = vadd.f32 %v173, %v1476
  %v1478 = vpop.f32.mrb[0].mxu0
  %1479 = vmatprep.mubr.bf16.mxu0 %v987
  %1480 = vmatmul.mubr.bf16.gmra.mrb[0].mxu0 %v665
  %v1481 = vpop.f32.mrb[0].mxu0
  %v1482 = vadd.f32 %v173, %v1481
  %v1483 = vpop.f32.mrb[0].mxu0
  %v1484 = vpop.f32.mrb[0].mxu0
  %v1485 = vadd.f32 %v173, %v1484
  %v1486 = vpop.f32.mrb[0].mxu0
  %1487 = vmatprep.mubr.bf16.mxu0 %v990
  %1488 = vmatmul.mubr.bf16.gmra.mrb[0].mxu0 %v667
  %v1489 = vpop.f32.mrb[0].mxu0
  %v1490 = vadd.f32 %v173, %v1489
  %v1491 = vpop.f32.mrb[0].mxu0
  %v1492 = vpop.f32.mrb[0].mxu0
  %v1493 = vadd.f32 %v173, %v1492
  %v1494 = vpop.f32.mrb[0].mxu0
  %1495 = vmatprep.mubr.bf16.mxu0 %v993
  %1496 = vmatmul.mubr.bf16.gmra.mrb[0].mxu0 %v669
  %v1497 = vpop.f32.mrb[0].mxu0
  %v1498 = vadd.f32 %v173, %v1497
  %v1499 = vpop.f32.mrb[0].mxu0
  %v1500 = vpop.f32.mrb[0].mxu0
  %v1501 = vadd.f32 %v173, %v1500
  %v1502 = vpop.f32.mrb[0].mxu0
  %1503 = vmatprep.mubr.bf16.mxu0 %v996
  %1504 = vmatmul.mubr.bf16.gmra.mrb[0].mxu0 %v671
  %v1505 = vpop.f32.mrb[0].mxu0
  %v1506 = vadd.f32 %v173, %v1505
  %v1507 = vpop.f32.mrb[0].mxu0
  %v1508 = vpop.f32.mrb[0].mxu0
  %v1509 = vadd.f32 %v173, %v1508
  %v1510 = vpop.f32.mrb[0].mxu0
  %1511 = vmatprep.mubr.bf16.mxu0 %v999
  %1512 = vmatmul.mubr.bf16.gmra.mrb[0].mxu0 %v673
  %v1513 = vpop.f32.mrb[0].mxu0
  %v1514 = vadd.f32 %v173, %v1513
  %v1515 = vpop.f32.mrb[0].mxu0
  %v1516 = vpop.f32.mrb[0].mxu0
  %v1517 = vadd.f32 %v173, %v1516
  %v1518 = vpop.f32.mrb[0].mxu0
  %1519 = vmatprep.mubr.bf16.mxu0 %v1002
  %1520 = vmatmul.mubr.bf16.gmra.mrb[0].mxu0 %v675
  %v1521 = vpop.f32.mrb[0].mxu0
  %v1522 = vadd.f32 %v173, %v1521
  %v1523 = vpop.f32.mrb[0].mxu0
  %v1524 = vpop.f32.mrb[0].mxu0
  %v1525 = vadd.f32 %v173, %v1524
  %v1526 = vpop.f32.mrb[0].mxu0
  %1527 = vmatprep.mubr.bf16.mxu0 %v1005
  %1528 = vmatmul.mubr.bf16.gmra.mrb[0].mxu0 %v677
  %v1529 = vpop.f32.mrb[0].mxu0
  %v1530 = vadd.f32 %v173, %v1529
  %v1531 = vpop.f32.mrb[0].mxu0
  %v1532 = vpop.f32.mrb[0].mxu0
  %v1533 = vadd.f32 %v173, %v1532
  %v1534 = vpop.f32.mrb[0].mxu0
  %1535 = vmatprep.mubr.bf16.mxu0 %v1008
  %1536 = vmatmul.mubr.bf16.gmra.mrb[0].mxu0 %v679
  %v1537 = vpop.f32.mrb[0].mxu0
  %v1538 = vadd.f32 %v173, %v1537
  %v1539 = vpop.f32.mrb[0].mxu0
  %v1540 = vpop.f32.mrb[0].mxu0
  %v1541 = vadd.f32 %v173, %v1540
  %v1542 = vpop.f32.mrb[0].mxu0
  %1543 = vmatprep.mubr.bf16.mxu0 %v1011
  %1544 = vmatmul.mubr.bf16.gmra.mrb[0].mxu0 %v681
  %v1545 = vpop.f32.mrb[0].mxu0
  %v1546 = vadd.f32 %v173, %v1545
  %v1547 = vpop.f32.mrb[0].mxu0
  %v1548 = vpop.f32.mrb[0].mxu0
  %v1549 = vadd.f32 %v173, %v1548
  %v1550 = vpop.f32.mrb[0].mxu0
  %1551 = vmatprep.mubr.bf16.mxu0 %v1014
  %1552 = vmatmul.mubr.bf16.gmra.mrb[0].mxu0 %v683
  %v1553 = vpop.f32.mrb[0].mxu0
  %v1554 = vadd.f32 %v173, %v1553
  %v1555 = vpop.f32.mrb[0].mxu0
  %v1556 = vpop.f32.mrb[0].mxu0
  %v1557 = vadd.f32 %v173, %v1556
  %v1558 = vpop.f32.mrb[0].mxu0
  %1559 = vmatprep.mubr.bf16.mxu0 %v1017
  %1560 = vmatmul.mubr.bf16.gmra.mrb[0].mxu0 %v685
  %v1561 = vpop.f32.mrb[0].mxu0
  %v1562 = vadd.f32 %v173, %v1561
  %v1563 = vpop.f32.mrb[0].mxu0
  %v1564 = vpop.f32.mrb[0].mxu0
  %v1565 = vadd.f32 %v173, %v1564
  %v1566 = vpop.f32.mrb[0].mxu0
  %1567 = vdwg.mxu0
  %v1568 = vmax.f32 %v1058, 0.0
  %v1569 = vmax.f32 %v1061, 0.0
  %v1570 = vmax.f32 %v1066, 0.0
  %v1571 = vmax.f32 %v1069, 0.0
  %v1572 = vmax.f32 %v1074, 0.0
  %v1573 = vmax.f32 %v1077, 0.0
  %v1574 = vmax.f32 %v1082, 0.0
  %v1575 = vmax.f32 %v1085, 0.0
  %v1576 = vmax.f32 %v1090, 0.0
  %v1577 = vmax.f32 %v1093, 0.0
  %v1578 = vmax.f32 %v1098, 0.0
  %v1579 = vmax.f32 %v1101, 0.0
  %v1580 = vmax.f32 %v1106, 0.0
  %v1581 = vmax.f32 %v1109, 0.0
  %v1582 = vmax.f32 %v1114, 0.0
  %v1583 = vmax.f32 %v1117, 0.0
  %v1584 = vmax.f32 %v1122, 0.0
  %v1585 = vmax.f32 %v1125, 0.0
  %v1586 = vmax.f32 %v1130, 0.0
  %v1587 = vmax.f32 %v1133, 0.0
  %v1588 = vmax.f32 %v1138, 0.0
  %v1589 = vmax.f32 %v1141, 0.0
  %v1590 = vmax.f32 %v1146, 0.0
  %v1591 = vmax.f32 %v1149, 0.0
  %v1592 = vmax.f32 %v1154, 0.0
  %v1593 = vmax.f32 %v1157, 0.0
  %v1594 = vmax.f32 %v1162, 0.0
  %v1595 = vmax.f32 %v1165, 0.0
  %v1596 = vmax.f32 %v1170, 0.0
  %v1597 = vmax.f32 %v1173, 0.0
  %v1598 = vmax.f32 %v1178, 0.0
  %v1599 = vmax.f32 %v1181, 0.0
  %v1600 = vmax.f32 %v1186, 0.0
  %v1601 = vmax.f32 %v1189, 0.0
  %v1602 = vmax.f32 %v1194, 0.0
  %v1603 = vmax.f32 %v1197, 0.0
  %v1604 = vmax.f32 %v1202, 0.0
  %v1605 = vmax.f32 %v1205, 0.0
  %v1606 = vmax.f32 %v1210, 0.0
  %v1607 = vmax.f32 %v1213, 0.0
  %v1608 = vmax.f32 %v1218, 0.0
  %v1609 = vmax.f32 %v1221, 0.0
  %v1610 = vmax.f32 %v1226, 0.0
  %v1611 = vmax.f32 %v1229, 0.0
  %v1612 = vmax.f32 %v1234, 0.0
  %v1613 = vmax.f32 %v1237, 0.0
  %v1614 = vmax.f32 %v1242, 0.0
  %v1615 = vmax.f32 %v1245, 0.0
  %v1616 = vmax.f32 %v1250, 0.0
  %v1617 = vmax.f32 %v1253, 0.0
  %v1618 = vmax.f32 %v1258, 0.0
  %v1619 = vmax.f32 %v1261, 0.0
  %v1620 = vmax.f32 %v1266, 0.0
  %v1621 = vmax.f32 %v1269, 0.0
  %v1622 = vmax.f32 %v1274, 0.0
  %v1623 = vmax.f32 %v1277, 0.0
  %v1624 = vmax.f32 %v1282, 0.0
  %v1625 = vmax.f32 %v1285, 0.0
  %v1626 = vmax.f32 %v1290, 0.0
  %v1627 = vmax.f32 %v1293, 0.0
  %v1628 = vmax.f32 %v1298, 0.0
  %v1629 = vmax.f32 %v1301, 0.0
  %v1630 = vmax.f32 %v1306, 0.0
  %v1631 = vmax.f32 %v1309, 0.0
  %v1632 = vmax.f32 %v1314, 0.0
  %v1633 = vmax.f32 %v1317, 0.0
  %v1634 = vmax.f32 %v1322, 0.0
  %v1635 = vmax.f32 %v1325, 0.0
  %v1636 = vmax.f32 %v1330, 0.0
  %v1637 = vmax.f32 %v1333, 0.0
  %v1638 = vmax.f32 %v1338, 0.0
  %v1639 = vmax.f32 %v1341, 0.0
  %v1640 = vmax.f32 %v1346, 0.0
  %v1641 = vmax.f32 %v1349, 0.0
  %v1642 = vmax.f32 %v1354, 0.0
  %v1643 = vmax.f32 %v1357, 0.0
  %v1644 = vmax.f32 %v1362, 0.0
  %v1645 = vmax.f32 %v1365, 0.0
  %v1646 = vmax.f32 %v1370, 0.0
  %v1647 = vmax.f32 %v1373, 0.0
  %v1648 = vmax.f32 %v1378, 0.0
  %v1649 = vmax.f32 %v1381, 0.0
  %v1650 = vmax.f32 %v1386, 0.0
  %v1651 = vmax.f32 %v1389, 0.0
  %v1652 = vmax.f32 %v1394, 0.0
  %v1653 = vmax.f32 %v1397, 0.0
  %v1654 = vmax.f32 %v1402, 0.0
  %v1655 = vmax.f32 %v1405, 0.0
  %v1656 = vmax.f32 %v1410, 0.0
  %v1657 = vmax.f32 %v1413, 0.0
  %v1658 = vmax.f32 %v1418, 0.0
  %v1659 = vmax.f32 %v1421, 0.0
  %v1660 = vmax.f32 %v1426, 0.0
  %v1661 = vmax.f32 %v1429, 0.0
  %v1662 = vmax.f32 %v1434, 0.0
  %v1663 = vmax.f32 %v1437, 0.0
  %v1664 = vmax.f32 %v1442, 0.0
  %v1665 = vmax.f32 %v1445, 0.0
  %v1666 = vmax.f32 %v1450, 0.0
  %v1667 = vmax.f32 %v1453, 0.0
  %v1668 = vmax.f32 %v1458, 0.0
  %v1669 = vmax.f32 %v1461, 0.0
  %v1670 = vmax.f32 %v1466, 0.0
  %v1671 = vmax.f32 %v1469, 0.0
  %v1672 = vmax.f32 %v1474, 0.0
  %v1673 = vmax.f32 %v1477, 0.0
  %v1674 = vmax.f32 %v1482, 0.0
  %v1675 = vmax.f32 %v1485, 0.0
  %v1676 = vmax.f32 %v1490, 0.0
  %v1677 = vmax.f32 %v1493, 0.0
  %v1678 = vmax.f32 %v1498, 0.0
  %v1679 = vmax.f32 %v1501, 0.0
  %v1680 = vmax.f32 %v1506, 0.0
  %v1681 = vmax.f32 %v1509, 0.0
  %v1682 = vmax.f32 %v1514, 0.0
  %v1683 = vmax.f32 %v1517, 0.0
  %v1684 = vmax.f32 %v1522, 0.0
  %v1685 = vmax.f32 %v1525, 0.0
  %v1686 = vmax.f32 %v1530, 0.0
  %v1687 = vmax.f32 %v1533, 0.0
  %v1688 = vmax.f32 %v1538, 0.0
  %v1689 = vmax.f32 %v1541, 0.0
  %v1690 = vmax.f32 %v1546, 0.0
  %v1691 = vmax.f32 %v1549, 0.0
  %v1692 = vmax.f32 %v1554, 0.0
  %v1693 = vmax.f32 %v1557, 0.0
  %v1694 = vmax.f32 %v1562, 0.0
  %v1695 = vmax.f32 %v1565, 0.0
  %vm1696 = vcmask 130048
  %1697 = vst.msk [vmem:[%s3] sm:$0xff] %vm1696, %v1568
  %1698 = vst.msk [vmem:[%s3 + $0x8] sm:$0xff] %vm1696, %v1569
  %1699 = vst.msk [vmem:[%s3 + $0x10] sm:$0xff] %vm1696, %v1570
  %1700 = vst.msk [vmem:[%s3 + $0x18] sm:$0xff] %vm1696, %v1571
  %1701 = vst.msk [vmem:[%s3 + $0x20] sm:$0xff] %vm1696, %v1572
  %1702 = vst.msk [vmem:[%s3 + $0x28] sm:$0xff] %vm1696, %v1573
  %1703 = vst.msk [vmem:[%s3 + $0x30] sm:$0xff] %vm1696, %v1574
  %1704 = vst.msk [vmem:[%s3 + $0x38] sm:$0xff] %vm1696, %v1575
  %1705 = vst.msk [vmem:[%s3 + $0x40] sm:$0xff] %vm1696, %v1576
  %1706 = vst.msk [vmem:[%s3 + $0x48] sm:$0xff] %vm1696, %v1577
  %1707 = vst.msk [vmem:[%s3 + $0x50] sm:$0xff] %vm1696, %v1578
  %1708 = vst.msk [vmem:[%s3 + $0x58] sm:$0xff] %vm1696, %v1579
  %1709 = vst.msk [vmem:[%s3 + $0x60] sm:$0xff] %vm1696, %v1580
  %1710 = vst.msk [vmem:[%s3 + $0x68] sm:$0xff] %vm1696, %v1581
  %1711 = vst.msk [vmem:[%s3 + $0x70] sm:$0xff] %vm1696, %v1582
  %1712 = vst.msk [vmem:[%s3 + $0x78] sm:$0xff] %vm1696, %v1583
  %1713 = vst.msk [vmem:[%s3 + $0x80] sm:$0xff] %vm1696, %v1584
  %1714 = vst.msk [vmem:[%s3 + $0x88] sm:$0xff] %vm1696, %v1585
  %1715 = vst.msk [vmem:[%s3 + $0x90] sm:$0xff] %vm1696, %v1586
  %1716 = vst.msk [vmem:[%s3 + $0x98] sm:$0xff] %vm1696, %v1587
  %1717 = vst.msk [vmem:[%s3 + $0xa0] sm:$0xff] %vm1696, %v1588
  %1718 = vst.msk [vmem:[%s3 + $0xa8] sm:$0xff] %vm1696, %v1589
  %1719 = vst.msk [vmem:[%s3 + $0xb0] sm:$0xff] %vm1696, %v1590
  %1720 = vst.msk [vmem:[%s3 + $0xb8] sm:$0xff] %vm1696, %v1591
  %1721 = vst.msk [vmem:[%s3 + $0xc0] sm:$0xff] %vm1696, %v1592
  %1722 = vst.msk [vmem:[%s3 + $0xc8] sm:$0xff] %vm1696, %v1593
  %1723 = vst.msk [vmem:[%s3 + $0xd0] sm:$0xff] %vm1696, %v1594
  %1724 = vst.msk [vmem:[%s3 + $0xd8] sm:$0xff] %vm1696, %v1595
  %1725 = vst.msk [vmem:[%s3 + $0xe0] sm:$0xff] %vm1696, %v1596
  %1726 = vst.msk [vmem:[%s3 + $0xe8] sm:$0xff] %vm1696, %v1597
  %1727 = vst.msk [vmem:[%s3 + $0xf0] sm:$0xff] %vm1696, %v1598
  %1728 = vst.msk [vmem:[%s3 + $0xf8] sm:$0xff] %vm1696, %v1599
  %1729 = vst.msk [vmem:[%s3 + $0x100] sm:$0xff] %vm1696, %v1600
  %1730 = vst.msk [vmem:[%s3 + $0x108] sm:$0xff] %vm1696, %v1601
  %1731 = vst.msk [vmem:[%s3 + $0x110] sm:$0xff] %vm1696, %v1602
  %1732 = vst.msk [vmem:[%s3 + $0x118] sm:$0xff] %vm1696, %v1603
  %1733 = vst.msk [vmem:[%s3 + $0x120] sm:$0xff] %vm1696, %v1604
  %1734 = vst.msk [vmem:[%s3 + $0x128] sm:$0xff] %vm1696, %v1605
  %1735 = vst.msk [vmem:[%s3 + $0x130] sm:$0xff] %vm1696, %v1606
  %1736 = vst.msk [vmem:[%s3 + $0x138] sm:$0xff] %vm1696, %v1607
  %1737 = vst.msk [vmem:[%s3 + $0x140] sm:$0xff] %vm1696, %v1608
  %1738 = vst.msk [vmem:[%s3 + $0x148] sm:$0xff] %vm1696, %v1609
  %1739 = vst.msk [vmem:[%s3 + $0x150] sm:$0xff] %vm1696, %v1610
  %1740 = vst.msk [vmem:[%s3 + $0x158] sm:$0xff] %vm1696, %v1611
  %1741 = vst.msk [vmem:[%s3 + $0x160] sm:$0xff] %vm1696, %v1612
  %1742 = vst.msk [vmem:[%s3 + $0x168] sm:$0xff] %vm1696, %v1613
  %1743 = vst.msk [vmem:[%s3 + $0x170] sm:$0xff] %vm1696, %v1614
  %1744 = vst.msk [vmem:[%s3 + $0x178] sm:$0xff] %vm1696, %v1615
  %1745 = vst.msk [vmem:[%s3 + $0x180] sm:$0xff] %vm1696, %v1616
  %1746 = vst.msk [vmem:[%s3 + $0x188] sm:$0xff] %vm1696, %v1617
  %1747 = vst.msk [vmem:[%s3 + $0x190] sm:$0xff] %vm1696, %v1618
  %1748 = vst.msk [vmem:[%s3 + $0x198] sm:$0xff] %vm1696, %v1619
  %1749 = vst.msk [vmem:[%s3 + $0x1a0] sm:$0xff] %vm1696, %v1620
  %1750 = vst.msk [vmem:[%s3 + $0x1a8] sm:$0xff] %vm1696, %v1621
  %1751 = vst.msk [vmem:[%s3 + $0x1b0] sm:$0xff] %vm1696, %v1622
  %1752 = vst.msk [vmem:[%s3 + $0x1b8] sm:$0xff] %vm1696, %v1623
  %1753 = vst.msk [vmem:[%s3 + $0x1c0] sm:$0xff] %vm1696, %v1624
  %1754 = vst.msk [vmem:[%s3 + $0x1c8] sm:$0xff] %vm1696, %v1625
  %1755 = vst.msk [vmem:[%s3 + $0x1d0] sm:$0xff] %vm1696, %v1626
  %1756 = vst.msk [vmem:[%s3 + $0x1d8] sm:$0xff] %vm1696, %v1627
  %1757 = vst.msk [vmem:[%s3 + $0x1e0] sm:$0xff] %vm1696, %v1628
  %1758 = vst.msk [vmem:[%s3 + $0x1e8] sm:$0xff] %vm1696, %v1629
  %1759 = vst.msk [vmem:[%s3 + $0x1f0] sm:$0xff] %vm1696, %v1630
  %1760 = vst.msk [vmem:[%s3 + $0x1f8] sm:$0xff] %vm1696, %v1631
  %1761 = vst.msk [vmem:[%s3 + $0x200] sm:$0xff] %vm1696, %v1632
  %1762 = vst.msk [vmem:[%s3 + $0x208] sm:$0xff] %vm1696, %v1633
  %1763 = vst.msk [vmem:[%s3 + $0x210] sm:$0xff] %vm1696, %v1634
  %1764 = vst.msk [vmem:[%s3 + $0x218] sm:$0xff] %vm1696, %v1635
  %1765 = vst.msk [vmem:[%s3 + $0x220] sm:$0xff] %vm1696, %v1636
  %1766 = vst.msk [vmem:[%s3 + $0x228] sm:$0xff] %vm1696, %v1637
  %1767 = vst.msk [vmem:[%s3 + $0x230] sm:$0xff] %vm1696, %v1638
  %1768 = vst.msk [vmem:[%s3 + $0x238] sm:$0xff] %vm1696, %v1639
  %1769 = vst.msk [vmem:[%s3 + $0x240] sm:$0xff] %vm1696, %v1640
  %1770 = vst.msk [vmem:[%s3 + $0x248] sm:$0xff] %vm1696, %v1641
  %1771 = vst.msk [vmem:[%s3 + $0x250] sm:$0xff] %vm1696, %v1642
  %1772 = vst.msk [vmem:[%s3 + $0x258] sm:$0xff] %vm1696, %v1643
  %1773 = vst.msk [vmem:[%s3 + $0x260] sm:$0xff] %vm1696, %v1644
  %1774 = vst.msk [vmem:[%s3 + $0x268] sm:$0xff] %vm1696, %v1645
  %1775 = vst.msk [vmem:[%s3 + $0x270] sm:$0xff] %vm1696, %v1646
  %1776 = vst.msk [vmem:[%s3 + $0x278] sm:$0xff] %vm1696, %v1647
  %1777 = vst.msk [vmem:[%s3 + $0x280] sm:$0xff] %vm1696, %v1648
  %1778 = vst.msk [vmem:[%s3 + $0x288] sm:$0xff] %vm1696, %v1649
  %1779 = vst.msk [vmem:[%s3 + $0x290] sm:$0xff] %vm1696, %v1650
  %1780 = vst.msk [vmem:[%s3 + $0x298] sm:$0xff] %vm1696, %v1651
  %1781 = vst.msk [vmem:[%s3 + $0x2a0] sm:$0xff] %vm1696, %v1652
  %1782 = vst.msk [vmem:[%s3 + $0x2a8] sm:$0xff] %vm1696, %v1653
  %1783 = vst.msk [vmem:[%s3 + $0x2b0] sm:$0xff] %vm1696, %v1654
  %1784 = vst.msk [vmem:[%s3 + $0x2b8] sm:$0xff] %vm1696, %v1655
  %1785 = vst.msk [vmem:[%s3 + $0x2c0] sm:$0xff] %vm1696, %v1656
  %1786 = vst.msk [vmem:[%s3 + $0x2c8] sm:$0xff] %vm1696, %v1657
  %1787 = vst.msk [vmem:[%s3 + $0x2d0] sm:$0xff] %vm1696, %v1658
  %1788 = vst.msk [vmem:[%s3 + $0x2d8] sm:$0xff] %vm1696, %v1659
  %1789 = vst.msk [vmem:[%s3 + $0x2e0] sm:$0xff] %vm1696, %v1660
  %1790 = vst.msk [vmem:[%s3 + $0x2e8] sm:$0xff] %vm1696, %v1661
  %1791 = vst.msk [vmem:[%s3 + $0x2f0] sm:$0xff] %vm1696, %v1662
  %1792 = vst.msk [vmem:[%s3 + $0x2f8] sm:$0xff] %vm1696, %v1663
  %1793 = vst.msk [vmem:[%s3 + $0x300] sm:$0xff] %vm1696, %v1664
  %1794 = vst.msk [vmem:[%s3 + $0x308] sm:$0xff] %vm1696, %v1665
  %1795 = vst.msk [vmem:[%s3 + $0x310] sm:$0xff] %vm1696, %v1666
  %1796 = vst.msk [vmem:[%s3 + $0x318] sm:$0xff] %vm1696, %v1667
  %1797 = vst.msk [vmem:[%s3 + $0x320] sm:$0xff] %vm1696, %v1668
  %1798 = vst.msk [vmem:[%s3 + $0x328] sm:$0xff] %vm1696, %v1669
  %1799 = vst.msk [vmem:[%s3 + $0x330] sm:$0xff] %vm1696, %v1670
  %1800 = vst.msk [vmem:[%s3 + $0x338] sm:$0xff] %vm1696, %v1671
  %1801 = vst.msk [vmem:[%s3 + $0x340] sm:$0xff] %vm1696, %v1672
  %1802 = vst.msk [vmem:[%s3 + $0x348] sm:$0xff] %vm1696, %v1673
  %1803 = vst.msk [vmem:[%s3 + $0x350] sm:$0xff] %vm1696, %v1674
  %1804 = vst.msk [vmem:[%s3 + $0x358] sm:$0xff] %vm1696, %v1675
  %1805 = vst.msk [vmem:[%s3 + $0x360] sm:$0xff] %vm1696, %v1676
  %1806 = vst.msk [vmem:[%s3 + $0x368] sm:$0xff] %vm1696, %v1677
  %1807 = vst.msk [vmem:[%s3 + $0x370] sm:$0xff] %vm1696, %v1678
  %1808 = vst.msk [vmem:[%s3 + $0x378] sm:$0xff] %vm1696, %v1679
  %1809 = vst.msk [vmem:[%s3 + $0x380] sm:$0xff] %vm1696, %v1680
  %1810 = vst.msk [vmem:[%s3 + $0x388] sm:$0xff] %vm1696, %v1681
  %1811 = vst.msk [vmem:[%s3 + $0x390] sm:$0xff] %vm1696, %v1682
  %1812 = vst.msk [vmem:[%s3 + $0x398] sm:$0xff] %vm1696, %v1683
  %1813 = vst.msk [vmem:[%s3 + $0x3a0] sm:$0xff] %vm1696, %v1684
  %1814 = vst.msk [vmem:[%s3 + $0x3a8] sm:$0xff] %vm1696, %v1685
  %1815 = vst.msk [vmem:[%s3 + $0x3b0] sm:$0xff] %vm1696, %v1686
  %1816 = vst.msk [vmem:[%s3 + $0x3b8] sm:$0xff] %vm1696, %v1687
  %1817 = vst.msk [vmem:[%s3 + $0x3c0] sm:$0xff] %vm1696, %v1688
  %1818 = vst.msk [vmem:[%s3 + $0x3c8] sm:$0xff] %vm1696, %v1689
  %1819 = vst.msk [vmem:[%s3 + $0x3d0] sm:$0xff] %vm1696, %v1690
  %1820 = vst.msk [vmem:[%s3 + $0x3d8] sm:$0xff] %vm1696, %v1691
  %1821 = vst.msk [vmem:[%s3 + $0x3e0] sm:$0xff] %vm1696, %v1692
  %1822 = vst.msk [vmem:[%s3 + $0x3e8] sm:$0xff] %vm1696, %v1693
  %1823 = vst.msk [vmem:[%s3 + $0x3f0] sm:$0xff] %vm1696, %v1694
  %1824 = vst.msk [vmem:[%s3 + $0x3f8] sm:$0xff] %vm1696, %v1695
  // Predicated region
  $region14: #{tpu_custom_call.1} parent=0 // pred_check
    _
  $region15: #{tpu_custom_call.1} parent=0 // pred_check_branch
    %1826 = sbr.rel (0) target = $region17
  $region16: #{tpu_custom_call.1} parent=0 // pred_region
    _
  $region17: #{tpu_custom_call.1} parent=0 // pred_fallthru
    _
  // Predicated region
  $region18: #{tpu_custom_call.1} parent=0 // pred_check
    _
  $region19: #{tpu_custom_call.1} parent=0 // pred_check_branch
    %1828 = sbr.rel (0) target = $region21
  $region20: #{tpu_custom_call.1} parent=0 // pred_region
    _
  $region21: #{tpu_custom_call.1} parent=0 // pred_fallthru
    _

</llo_original>
